<compile_context>
chip_gen: v7x
topology: tpu7x:2x2x1
jax: 0.10.0
libtpu: 0.0.40
codegen_flags: <defaults>
</compile_context>

<pallas_src>
import jax
import jax.numpy as jnp
from jax.experimental import pallas as pl
from jax.experimental.pallas import tpu as pltpu

HID1 = 256       # features[0]: Linear(state_dim, 256)
HID2 = 128       # features[2]: Linear(256, 128)
LANE = 128       # TPU lane width / padded fused-head width
NEG_BIG = -1e30  # softmax mask folded into the fused head bias

_PRECISION = jax.lax.Precision.HIGHEST


def _round_up(n, m):
    return ((n + m - 1) // m) * m


def _pick_batch_tile(B, sd_pad):
    """Batch tile: big enough to amortize ~0.35us/step overhead, small enough
    to fit v5e's 16 MiB default scoped-VMEM budget, >=2 grid steps when the
    batch allows it (v7x megacore), minimal last-tile padding."""
    vmem_budget = 12 * 1024 * 1024  # headroom under the v5e 16 MiB default
    # resident weights + biases (counted double-buffered, conservatively)
    weight_bytes = 2 * 4 * (sd_pad * HID1 + HID1
                            + HID1 * HID2 + HID2
                            + HID2 * LANE + LANE)
    # per batch-row: double-buffered x + out tiles, f32 h1/h2/z intermediates
    per_row_bytes = 4 * (2 * sd_pad + 2 * LANE + HID1 + HID2 + LANE)
    cap = (vmem_budget - weight_bytes) // per_row_bytes
    cap = max(8, min(2048, cap))
    min_tiles = 2 if B > 8 else 1          # shard across v7x's 2 TensorCores
    n_tiles = max(pl.cdiv(B, cap), min_tiles)
    tb = _round_up(pl.cdiv(B, n_tiles), 8)
    return tb


def _actor_critic_kernel(x_ref, w1_ref, b1_ref, w2_ref, b2_ref,
                         wh_ref, bh_ref, out_ref):
    x = x_ref[...]

    # features: Linear -> ReLU -> Linear -> ReLU
    h1 = jnp.dot(x, w1_ref[...], preferred_element_type=jnp.float32,
                 precision=_PRECISION) + b1_ref[...]
    h1 = jnp.maximum(h1, 0.0)
    h2 = jnp.dot(h1, w2_ref[...], preferred_element_type=jnp.float32,
                 precision=_PRECISION) + b2_ref[...]
    h2 = jnp.maximum(h2, 0.0)

    # fused actor + critic head: single (HID2, LANE) MXU matmul.
    # cols [0, action_dim): actor logits; cols [action_dim, LANE-1): -1e30 bias
    # (mask folded into bh); col LANE-1: critic value.
    z = jnp.dot(h2, wh_ref[...], preferred_element_type=jnp.float32,
                precision=_PRECISION) + bh_ref[...]

    value = z[:, LANE - 1:LANE]
    col = jax.lax.broadcasted_iota(jnp.int32, z.shape, 1)
    is_value_col = col == (LANE - 1)

    # softmax over the actor block; padded / critic columns underflow to 0
    logits = jnp.where(is_value_col, NEG_BIG, z)
    m = jnp.max(logits, axis=-1, keepdims=True)
    e = jnp.exp(logits - m)
    denom = jnp.sum(e, axis=-1, keepdims=True)
    probs = e * pl.reciprocal(denom, approx=False)

    # single full-width lane-dense store: probs in cols [:LANE-1], value folded
    # into col LANE-1 (no partial vst.msk store)
    out_ref[...] = jnp.where(is_value_col, value, probs)


def actor_critic_forward(x, params, action_dim):
    """x: (B, state_dim) float32. Returns (action_probs (B, action_dim), value (B, 1))."""
    assert 1 <= action_dim <= LANE - 1
    B, state_dim = x.shape
    w1_p, b1, w2, b2, wh, bh = params
    sd_pad = w1_p.shape[0]

    tb = _pick_batch_tile(B, sd_pad)
    b_pad = _round_up(B, tb)

    x_p = x
    if b_pad != B or sd_pad != state_dim:
        x_p = jnp.zeros((b_pad, sd_pad), x.dtype).at[:B, :state_dim].set(x)

    grid = (b_pad // tb,)

    flops = 2 * b_pad * (sd_pad * HID1 + HID1 * HID2 + HID2 * LANE)
    bytes_accessed = 4 * (b_pad * (sd_pad + LANE)
                          + sd_pad * HID1 + HID1
                          + HID1 * HID2 + HID2
                          + HID2 * LANE + LANE)
    cost = pl.CostEstimate(flops=flops,
                           transcendentals=b_pad * LANE,
                           bytes_accessed=bytes_accessed)

    out = pl.pallas_call(
        _actor_critic_kernel,
        out_shape=jax.ShapeDtypeStruct((b_pad, LANE), jnp.float32),
        grid_spec=pltpu.PrefetchScalarGridSpec(
            num_scalar_prefetch=0,
            grid=grid,
            in_specs=[
                pl.BlockSpec((tb, sd_pad), lambda i: (i, 0)),     # x (batch-tiled)
                pl.BlockSpec((sd_pad, HID1), lambda i: (0, 0)),   # w1 (resident)
                pl.BlockSpec((1, HID1), lambda i: (0, 0)),        # b1
                pl.BlockSpec((HID1, HID2), lambda i: (0, 0)),     # w2
                pl.BlockSpec((1, HID2), lambda i: (0, 0)),        # b2
                pl.BlockSpec((HID2, LANE), lambda i: (0, 0)),     # fused head W
                pl.BlockSpec((1, LANE), lambda i: (0, 0)),        # fused head b
            ],
            out_specs=pl.BlockSpec((tb, LANE), lambda i: (i, 0)),
        ),
        compiler_params=pltpu.CompilerParams(
            dimension_semantics=("parallel",)),
        cost_estimate=cost,
    )(x_p, w1_p, b1, w2, b2, wh, bh)

    probs = out[:B, :action_dim]
    value = out[:B, LANE - 1:LANE]
    return probs, value


def init_params(key, state_dim, action_dim):
    """Deterministic PyTorch-style Linear init: U(-1/sqrt(fan_in), 1/sqrt(fan_in))."""
    assert 1 <= action_dim <= LANE - 1

    def linear(key, fan_in, fan_out):
        kw, kb = jax.random.split(key)
        bound = 1.0 / jnp.sqrt(jnp.float32(fan_in))
        w = jax.random.uniform(kw, (fan_in, fan_out), jnp.float32, -bound, bound)
        b = jax.random.uniform(kb, (1, fan_out), jnp.float32, -bound, bound)
        return w, b

    k1, k2, k3, k4 = jax.random.split(key, 4)
    w1, b1 = linear(k1, state_dim, HID1)
    w2, b2 = linear(k2, HID1, HID2)
    wa, ba = linear(k3, HID2, action_dim)
    wc, bc = linear(k4, HID2, 1)

    # pad the first layer's input (K) axis to a lane multiple for aligned loads
    sd_pad = _round_up(max(state_dim, LANE), LANE)
    w1_p = jnp.zeros((sd_pad, HID1), jnp.float32).at[:state_dim].set(w1)

    # fused head weight / bias, width LANE:
    #   cols [0:action_dim]        = actor weights / bias
    #   cols [action_dim:LANE-1]   = zero weight, bias -1e30 (softmax mask)
    #   col  LANE-1                = critic weight / bias
    # NOTE: the critic stash in column LANE-1 relies on action_dim <= LANE-1
    # (asserted above); that column is always excluded from the softmax.
    wh = jnp.zeros((HID2, LANE), jnp.float32)
    wh = wh.at[:, :action_dim].set(wa)
    wh = wh.at[:, LANE - 1:LANE].set(wc)

    bh = jnp.full((1, LANE), NEG_BIG, jnp.float32)
    bh = bh.at[:, :action_dim].set(ba)
    bh = bh.at[:, LANE - 1:LANE].set(bc)

    params = (w1_p, b1, w2, b2, wh, bh)
    raw_params = (w1, b1, w2, b2, wa, ba, wc, bc)
    return params, raw_params


def reference_forward(x, raw_params):
    w1, b1, w2, b2, wa, ba, wc, bc = raw_params
    h = jnp.maximum(x @ w1 + b1, 0.0)
    h = jnp.maximum(h @ w2 + b2, 0.0)
    probs = jax.nn.softmax(h @ wa + ba, axis=-1)
    value = h @ wc + bc
    return probs, value


if __name__ == "__main__":
    batch, state_dim, action_dim = 8, 16, 4

    key = jax.random.PRNGKey(0)
    kx, kp = jax.random.split(key)
    x = jax.random.normal(kx, (batch, state_dim), jnp.float32)

    params, raw_params = init_params(kp, state_dim, action_dim)

    probs, value = jax.block_until_ready(actor_critic_forward(x, params, action_dim))
    probs_ref, value_ref = reference_forward(x, raw_params)

    assert probs.shape == (batch, action_dim)
    assert value.shape == (batch, 1)
    assert jnp.allclose(probs, probs_ref, atol=1e-5, rtol=1e-5)
    assert jnp.allclose(value, value_ref, atol=1e-5, rtol=1e-5)
    assert jnp.allclose(jnp.sum(probs, axis=-1), 1.0, atol=1e-5)

    print("KERNEL_OK")
</pallas_src>

<mosaic_0001>
module attributes {stable_mosaic.version = 11 : i64} {
  func.func @_actor_critic_kernel(%arg0: i32, %arg1: memref<8x128xf32, #tpu.memory_space<vmem>>, %arg2: memref<128x256xf32, #tpu.memory_space<vmem>>, %arg3: memref<1x256xf32, #tpu.memory_space<vmem>>, %arg4: memref<256x128xf32, #tpu.memory_space<vmem>>, %arg5: memref<1x128xf32, #tpu.memory_space<vmem>>, %arg6: memref<128x128xf32, #tpu.memory_space<vmem>>, %arg7: memref<1x128xf32, #tpu.memory_space<vmem>>, %arg8: memref<8x128xf32, #tpu.memory_space<vmem>>) attributes {dimension_semantics = [#tpu.dimension_semantics<parallel>], iteration_bounds = array<i64: 1>, scalar_prefetch = 0 : i64, scratch_operands = 0 : i64, tpu.core_type = #tpu.core_type<tc>, window_params = [{transform_indices = @transform_0, window_bounds = array<i64: 8, 128>}, {pipeline_mode = #tpu.pipeline_mode<synchronous>, transform_indices = @transform_1, window_bounds = array<i64: 128, 256>}, {pipeline_mode = #tpu.pipeline_mode<synchronous>, transform_indices = @transform_2, window_bounds = array<i64: 1, 256>}, {pipeline_mode = #tpu.pipeline_mode<synchronous>, transform_indices = @transform_3, window_bounds = array<i64: 256, 128>}, {pipeline_mode = #tpu.pipeline_mode<synchronous>, transform_indices = @transform_4, window_bounds = array<i64: 1, 128>}, {pipeline_mode = #tpu.pipeline_mode<synchronous>, transform_indices = @transform_5, window_bounds = array<i64: 128, 128>}, {pipeline_mode = #tpu.pipeline_mode<synchronous>, transform_indices = @transform_6, window_bounds = array<i64: 1, 128>}, {transform_indices = @transform_7, window_bounds = array<i64: 8, 128>}]} {
    %c0 = arith.constant 0 : index
    %c0_0 = arith.constant 0 : index
    %0 = vector.load %arg1[%c0, %c0_0] : memref<8x128xf32, #tpu.memory_space<vmem>>, vector<8x128xf32>
    %c0_1 = arith.constant 0 : index
    %c0_2 = arith.constant 0 : index
    %1 = vector.load %arg2[%c0_1, %c0_2] : memref<128x256xf32, #tpu.memory_space<vmem>>, vector<128x256xf32>
    %cst = arith.constant dense<0.000000e+00> : vector<8x256xf32>
    %2 = tpu.matmul %0, %1, %cst {dimension_numbers = #tpu.dot_dimension_numbers<[1], [0], [0], [1], [0, 0, 1, 1], [], []>, precision = #tpu.contract_precision<fp32>} : vector<8x128xf32>, vector<128x256xf32>, vector<8x256xf32> -> vector<8x256xf32>
    %c0_3 = arith.constant 0 : index
    %c0_4 = arith.constant 0 : index
    %3 = vector.load %arg3[%c0_3, %c0_4] : memref<1x256xf32, #tpu.memory_space<vmem>>, vector<1x256xf32>
    %4 = vector.broadcast %3 : vector<1x256xf32> to vector<8x256xf32>
    %5 = arith.addf %2, %4 : vector<8x256xf32>
    %cst_5 = arith.constant 0.000000e+00 : f32
    %6 = vector.broadcast %cst_5 : f32 to vector<8x256xf32>
    %7 = arith.maximumf %5, %6 : vector<8x256xf32>
    %c0_6 = arith.constant 0 : index
    %c0_7 = arith.constant 0 : index
    %8 = vector.load %arg4[%c0_6, %c0_7] : memref<256x128xf32, #tpu.memory_space<vmem>>, vector<256x128xf32>
    %cst_8 = arith.constant dense<0.000000e+00> : vector<8x128xf32>
    %9 = tpu.matmul %7, %8, %cst_8 {dimension_numbers = #tpu.dot_dimension_numbers<[1], [0], [0], [1], [0, 0, 1, 1], [], []>, precision = #tpu.contract_precision<fp32>} : vector<8x256xf32>, vector<256x128xf32>, vector<8x128xf32> -> vector<8x128xf32>
    %c0_9 = arith.constant 0 : index
    %c0_10 = arith.constant 0 : index
    %10 = vector.load %arg5[%c0_9, %c0_10] : memref<1x128xf32, #tpu.memory_space<vmem>>, vector<1x128xf32>
    %11 = vector.broadcast %10 : vector<1x128xf32> to vector<8x128xf32>
    %12 = arith.addf %9, %11 : vector<8x128xf32>
    %cst_11 = arith.constant 0.000000e+00 : f32
    %13 = vector.broadcast %cst_11 : f32 to vector<8x128xf32>
    %14 = arith.maximumf %12, %13 : vector<8x128xf32>
    %c0_12 = arith.constant 0 : index
    %c0_13 = arith.constant 0 : index
    %15 = vector.load %arg6[%c0_12, %c0_13] : memref<128x128xf32, #tpu.memory_space<vmem>>, vector<128x128xf32>
    %cst_14 = arith.constant dense<0.000000e+00> : vector<8x128xf32>
    %16 = tpu.matmul %14, %15, %cst_14 {dimension_numbers = #tpu.dot_dimension_numbers<[1], [0], [0], [1], [0, 0, 1, 1], [], []>, precision = #tpu.contract_precision<fp32>} : vector<8x128xf32>, vector<128x128xf32>, vector<8x128xf32> -> vector<8x128xf32>
    %c0_15 = arith.constant 0 : index
    %c0_16 = arith.constant 0 : index
    %17 = vector.load %arg7[%c0_15, %c0_16] : memref<1x128xf32, #tpu.memory_space<vmem>>, vector<1x128xf32>
    %18 = vector.broadcast %17 : vector<1x128xf32> to vector<8x128xf32>
    %19 = arith.addf %16, %18 : vector<8x128xf32>
    %20 = vector.extract_strided_slice %19 {offsets = [0, 127], sizes = [8, 1], strides = [1, 1]} : vector<8x128xf32> to vector<8x1xf32>
    %21 = tpu.iota {dimensions = array<i32: 1>} : vector<8x128xi32>
    %c127_i32 = arith.constant 127 : i32
    %22 = vector.broadcast %c127_i32 : i32 to vector<8x128xi32>
    %23 = arith.cmpi eq, %21, %22 : vector<8x128xi32>
    %cst_17 = arith.constant -1.000000e+30 : f32
    %24 = vector.broadcast %cst_17 : f32 to vector<8x128xf32>
    %25 = arith.select %23, %24, %19 : vector<8x128xi1>, vector<8x128xf32>
    %cst_18 = arith.constant dense<0xFF800000> : vector<8xf32>
    %26 = vector.multi_reduction <maximumf>, %25, %cst_18 [1] : vector<8x128xf32> to vector<8xf32>
    %27 = vector.shape_cast %26 : vector<8xf32> to vector<8x1xf32>
    %28 = vector.broadcast %27 : vector<8x1xf32> to vector<8x128xf32>
    %29 = arith.subf %25, %28 : vector<8x128xf32>
    %30 = math.exp %29 : vector<8x128xf32>
    %cst_19 = arith.constant dense<0.000000e+00> : vector<8xf32>
    %31 = vector.multi_reduction <add>, %30, %cst_19 [1] : vector<8x128xf32> to vector<8xf32>
    %32 = vector.shape_cast %31 : vector<8xf32> to vector<8x1xf32>
    %33 = tpu.reciprocal %32 : vector<8x1xf32> -> vector<8x1xf32>
    %34 = vector.broadcast %33 : vector<8x1xf32> to vector<8x128xf32>
    %35 = arith.mulf %30, %34 : vector<8x128xf32>
    %36 = vector.shape_cast %20 : vector<8x1xf32> to vector<8x1xf32>
    %37 = vector.broadcast %36 : vector<8x1xf32> to vector<8x128xf32>
    %38 = arith.select %23, %37, %35 : vector<8x128xi1>, vector<8x128xf32>
    %c0_20 = arith.constant 0 : index
    %c0_21 = arith.constant 0 : index
    %39 = vector.load %arg8[%c0_20, %c0_21] : memref<8x128xf32, #tpu.memory_space<vmem>>, vector<8x128xf32>
    tpu.vector_store %arg8[%c0_20, %c0_21], %38 {strides = array<i32>} : memref<8x128xf32, #tpu.memory_space<vmem>>, vector<8x128xf32>,
    return
  }
  func.func @transform_0(%arg0: i32) -> (i32, i32) {
    %c0_i32 = arith.constant 0 : i32
    %c0_i32_0 = arith.constant 0 : i32
    return %arg0, %c0_i32 : i32, i32
  }
  func.func @transform_1(%arg0: i32) -> (i32, i32) {
    %c0_i32 = arith.constant 0 : i32
    %c0_i32_0 = arith.constant 0 : i32
    %c0_i32_1 = arith.constant 0 : i32
    return %c0_i32, %c0_i32_0 : i32, i32
  }
  func.func @transform_2(%arg0: i32) -> (i32, i32) {
    %c0_i32 = arith.constant 0 : i32
    %c0_i32_0 = arith.constant 0 : i32
    %c0_i32_1 = arith.constant 0 : i32
    return %c0_i32, %c0_i32_0 : i32, i32
  }
  func.func @transform_3(%arg0: i32) -> (i32, i32) {
    %c0_i32 = arith.constant 0 : i32
    %c0_i32_0 = arith.constant 0 : i32
    %c0_i32_1 = arith.constant 0 : i32
    return %c0_i32, %c0_i32_0 : i32, i32
  }
  func.func @transform_4(%arg0: i32) -> (i32, i32) {
    %c0_i32 = arith.constant 0 : i32
    %c0_i32_0 = arith.constant 0 : i32
    %c0_i32_1 = arith.constant 0 : i32
    return %c0_i32, %c0_i32_0 : i32, i32
  }
  func.func @transform_5(%arg0: i32) -> (i32, i32) {
    %c0_i32 = arith.constant 0 : i32
    %c0_i32_0 = arith.constant 0 : i32
    %c0_i32_1 = arith.constant 0 : i32
    return %c0_i32, %c0_i32_0 : i32, i32
  }
  func.func @transform_6(%arg0: i32) -> (i32, i32) {
    %c0_i32 = arith.constant 0 : i32
    %c0_i32_0 = arith.constant 0 : i32
    %c0_i32_1 = arith.constant 0 : i32
    return %c0_i32, %c0_i32_0 : i32, i32
  }
  func.func @transform_7(%arg0: i32) -> (i32, i32) {
    %c0_i32 = arith.constant 0 : i32
    %c0_i32_0 = arith.constant 0 : i32
    return %arg0, %c0_i32 : i32, i32
  }
}

</mosaic_0001>

<llo_original>
// kernel: tpu_custom_call.1
$region0: #{tpu_custom_call.1}
  #allocation0 [shape = 'u32[]', space=smem, size = 0x4, offset = 0x4, fixed_abs, tag = 'smem constant byte address 0x4 - core index']
  #allocation1 [shape = 'u32[144,128]{1,0:T(1,128)}', space=vmem, size = 0x12000, scoped, tag = 'internal scratch']
  %s0 = inlined_call_operand.hbm [shape: f32[8,128], index: 0, kind: input, shape index: {}]
  %s1 = inlined_call_operand.hbm [shape: f32[128,256], index: 1, kind: input, shape index: {}]
  %s2 = inlined_call_operand.vmem [shape: f32[1,256], index: 2, kind: input, shape index: {}]
  %s3 = inlined_call_operand.hbm [shape: f32[256,128], index: 3, kind: input, shape index: {}]
  %s4 = inlined_call_operand.vmem [shape: f32[1,128], index: 4, kind: input, shape index: {}]
  %s5 = inlined_call_operand.hbm [shape: f32[128,128], index: 5, kind: input, shape index: {}]
  %s6 = inlined_call_operand.vmem [shape: f32[1,128], index: 6, kind: input, shape index: {}]
  %s7 = inlined_call_operand.hbm [shape: f32[8,128], index: 7, kind: output, shape index: {}]
  %s8 = sld [smem:[#allocation0]]
  $region54: #{tpu_custom_call.1} parent=0
    _
  %s10 = ssub.s32 1, %s8
  %s11 = scalar_select 0, %s10, %s8
  $region1: #{tpu_custom_call.1} parent=0
    #allocation2 [shape = 'u8[4096]{0}', space=vmem, size = 0x1000, scoped, tag = 'input window, operand 0, single buffered']
    #allocation3 [shape = 's32[1]{0}', space=sflag, size = 0x4, scoped, tag = 'scoped memory for tpu_custom_call.1']
    #allocation4 [shape = 's32[1]{0}', space=sflag, size = 0x4, scoped, tag = 'scoped memory for tpu_custom_call.1']
    #allocation5 [shape = 'u8[131072]{0}', space=vmem, size = 0x20000, scoped, tag = 'input window, operand 1, single buffered']
    #allocation6 [shape = 's32[1]{0}', space=sflag, size = 0x4, scoped, tag = 'scoped memory for tpu_custom_call.1']
    #allocation7 [shape = 'u8[131072]{0}', space=vmem, size = 0x20000, scoped, tag = 'input window, operand 3, single buffered']
    #allocation8 [shape = 'u8[65536]{0}', space=vmem, size = 0x10000, scoped, tag = 'input window, operand 5, single buffered']
    #allocation9 [shape = 's32[1]{0}', space=sflag, size = 0x4, scoped, tag = 'scoped memory for tpu_custom_call.1']
    #allocation10 [shape = 'u8[4096]{0}', space=vmem, size = 0x1000, scoped, tag = 'output window, operand 0, single buffered']
    %12 = vsyncpa [#allocation3], 0
    %13 = vsyncpa [#allocation6], 0
    %14 = vsyncpa [#allocation9], 0
    %15 = vsyncpa [#allocation4], 0
    // Predicated region
    $region2: #{tpu_custom_call.1} parent=1 // pred_check
      _
    $region3: #{tpu_custom_call.1} parent=1 // pred_check_branch
      %17 = sbr.rel (0) target = $region5
    $region4: #{tpu_custom_call.1} parent=1 // pred_region
      %s19 = ssub.s32 128, 128
      %20 = vsyncadd [#allocation3], %s19
      %s22 = sshll.u32 [#allocation2], 4
      %s23 = int_to_ptr.vmem [resolvable:$true] %s22
      %25 = dma.hbm_to_vmem [thread:$0]  %s0, 128, %s23, [#allocation3]
    $region5: #{tpu_custom_call.1} parent=1 // pred_fallthru
      _
    // Predicated region
    $region6: #{tpu_custom_call.1} parent=1 // pred_check
      _
    $region7: #{tpu_custom_call.1} parent=1 // pred_check_branch
      %27 = sbr.rel (0) target = $region9
    $region8: #{tpu_custom_call.1} parent=1 // pred_region
      %s29 = ssub.s32 4096, 4096
      %30 = vsyncadd [#allocation6], %s29
      %s31 = sshll.u32 [#allocation5], 4
      %s32 = int_to_ptr.vmem [resolvable:$true] %s31
      %37 = dma.hbm_to_vmem [thread:$0]  %s1, 4096, %s32, [#allocation6], 256, 256, 16
    $region9: #{tpu_custom_call.1} parent=1 // pred_fallthru
      _
    // Predicated region
    $region10: #{tpu_custom_call.1} parent=1 // pred_check
      _
    $region11: #{tpu_custom_call.1} parent=1 // pred_check_branch
      %39 = sbr.rel (0) target = $region13
    $region12: #{tpu_custom_call.1} parent=1 // pred_region
      _
    $region13: #{tpu_custom_call.1} parent=1 // pred_fallthru
      _
    // Predicated region
    $region14: #{tpu_custom_call.1} parent=1 // pred_check
      _
    $region15: #{tpu_custom_call.1} parent=1 // pred_check_branch
      %41 = sbr.rel (0) target = $region17
    $region16: #{tpu_custom_call.1} parent=1 // pred_region
      %s43 = ssub.s32 4096, 4096
      %44 = vsyncadd [#allocation6], %s43
      %s45 = sshll.u32 [#allocation7], 4
      %s46 = int_to_ptr.vmem [resolvable:$true] %s45
      %51 = dma.hbm_to_vmem [thread:$0]  %s3, 4096, %s46, [#allocation6], 128, 128, 8
    $region17: #{tpu_custom_call.1} parent=1 // pred_fallthru
      _
    // Predicated region
    $region18: #{tpu_custom_call.1} parent=1 // pred_check
      _
    $region19: #{tpu_custom_call.1} parent=1 // pred_check_branch
      %53 = sbr.rel (0) target = $region21
    $region20: #{tpu_custom_call.1} parent=1 // pred_region
      _
    $region21: #{tpu_custom_call.1} parent=1 // pred_fallthru
      _
    // Predicated region
    $region22: #{tpu_custom_call.1} parent=1 // pred_check
      _
    $region23: #{tpu_custom_call.1} parent=1 // pred_check_branch
      %55 = sbr.rel (0) target = $region25
    $region24: #{tpu_custom_call.1} parent=1 // pred_region
      %s57 = ssub.s32 2048, 2048
      %58 = vsyncadd [#allocation9], %s57
      %s59 = sshll.u32 [#allocation8], 4
      %s60 = int_to_ptr.vmem [resolvable:$true] %s59
      %65 = dma.hbm_to_vmem [thread:$0]  %s5, 2048, %s60, [#allocation9], 128, 128, 8
    $region25: #{tpu_custom_call.1} parent=1 // pred_fallthru
      _
    // Predicated region
    $region26: #{tpu_custom_call.1} parent=1 // pred_check
      _
    $region27: #{tpu_custom_call.1} parent=1 // pred_check_branch
      %67 = sbr.rel (0) target = $region29
    $region28: #{tpu_custom_call.1} parent=1 // pred_region
      _
    $region29: #{tpu_custom_call.1} parent=1 // pred_fallthru
      _
    // Predicated region
    $region30: #{tpu_custom_call.1} parent=1 // pred_check
      _
    $region31: #{tpu_custom_call.1} parent=1 // pred_check_branch
      %69 = sbr.rel (0) target = $region33
    $region32: #{tpu_custom_call.1} parent=1 // pred_region
      %70 = dma.done [#allocation3], 128
    $region33: #{tpu_custom_call.1} parent=1 // pred_fallthru
      _
    // Predicated region
    $region34: #{tpu_custom_call.1} parent=1 // pred_check
      _
    $region35: #{tpu_custom_call.1} parent=1 // pred_check_branch
      %72 = sbr.rel (0) target = $region37
    $region36: #{tpu_custom_call.1} parent=1 // pred_region
      %73 = dma.done [#allocation6], 4096
    $region37: #{tpu_custom_call.1} parent=1 // pred_fallthru
      _
    // Predicated region
    $region38: #{tpu_custom_call.1} parent=1 // pred_check
      _
    $region39: #{tpu_custom_call.1} parent=1 // pred_check_branch
      %75 = sbr.rel (0) target = $region41
    $region40: #{tpu_custom_call.1} parent=1 // pred_region
      %76 = dma.done [#allocation6], 4096
    $region41: #{tpu_custom_call.1} parent=1 // pred_fallthru
      _
    // Predicated region
    $region42: #{tpu_custom_call.1} parent=1 // pred_check
      _
    $region43: #{tpu_custom_call.1} parent=1 // pred_check_branch
      %78 = sbr.rel (0) target = $region45
    $region44: #{tpu_custom_call.1} parent=1 // pred_region
      %79 = dma.done [#allocation9], 2048
    $region45: #{tpu_custom_call.1} parent=1 // pred_fallthru
      _
    %v80 = vld [vmem:[#allocation2] sm:$0xff]
    %v81 = vld [vmem:[#allocation5] sm:$0xff]
    %v82 = vld [vmem:[#allocation5 + $0x8] sm:$0xff]
    %v83 = vld [vmem:[#allocation5 + $0x10] sm:$0xff]
    %v84 = vld [vmem:[#allocation5 + $0x18] sm:$0xff]
    %v85 = vld [vmem:[#allocation5 + $0x20] sm:$0xff]
    %v86 = vld [vmem:[#allocation5 + $0x28] sm:$0xff]
    %v87 = vld [vmem:[#allocation5 + $0x30] sm:$0xff]
    %v88 = vld [vmem:[#allocation5 + $0x38] sm:$0xff]
    %v89 = vld [vmem:[#allocation5 + $0x40] sm:$0xff]
    %v90 = vld [vmem:[#allocation5 + $0x48] sm:$0xff]
    %v91 = vld [vmem:[#allocation5 + $0x50] sm:$0xff]
    %v92 = vld [vmem:[#allocation5 + $0x58] sm:$0xff]
    %v93 = vld [vmem:[#allocation5 + $0x60] sm:$0xff]
    %v94 = vld [vmem:[#allocation5 + $0x68] sm:$0xff]
    %v95 = vld [vmem:[#allocation5 + $0x70] sm:$0xff]
    %v96 = vld [vmem:[#allocation5 + $0x78] sm:$0xff]
    %v97 = vld [vmem:[#allocation5 + $0x80] sm:$0xff]
    %v98 = vld [vmem:[#allocation5 + $0x88] sm:$0xff]
    %v99 = vld [vmem:[#allocation5 + $0x90] sm:$0xff]
    %v100 = vld [vmem:[#allocation5 + $0x98] sm:$0xff]
    %v101 = vld [vmem:[#allocation5 + $0xa0] sm:$0xff]
    %v102 = vld [vmem:[#allocation5 + $0xa8] sm:$0xff]
    %v103 = vld [vmem:[#allocation5 + $0xb0] sm:$0xff]
    %v104 = vld [vmem:[#allocation5 + $0xb8] sm:$0xff]
    %v105 = vld [vmem:[#allocation5 + $0xc0] sm:$0xff]
    %v106 = vld [vmem:[#allocation5 + $0xc8] sm:$0xff]
    %v107 = vld [vmem:[#allocation5 + $0xd0] sm:$0xff]
    %v108 = vld [vmem:[#allocation5 + $0xd8] sm:$0xff]
    %v109 = vld [vmem:[#allocation5 + $0xe0] sm:$0xff]
    %v110 = vld [vmem:[#allocation5 + $0xe8] sm:$0xff]
    %v111 = vld [vmem:[#allocation5 + $0xf0] sm:$0xff]
    %v112 = vld [vmem:[#allocation5 + $0xf8] sm:$0xff]
    %v113 = vld [vmem:[%s2] sm:$0x3]
    %v115 = vlaneseq
    %v116 = vshrl.u32 %v115, 7
    %v117 = vsub.s32 0, %v116
    %v118 = vrot.slane %v113, %v117
    %v119 = vlaneseq
    %v120 = vshrl.u32 %v119, 7
    %v121 = vsub.s32 1, %v120
    %v122 = vrot.slane %v113, %v121
    %v125 = vand.u32 %v82, 4294901760
    %126 = vmatprep.subr.mxu0 %v125
    %v127 = vand.u32 %v81, 4294901760
    %128 = vmatpush1.msra.mxu0 %v127
    %v129 = vand.u32 %v84, 4294901760
    %130 = vmatprep.subr.mxu0 %v129
    %v131 = vand.u32 %v83, 4294901760
    %132 = vmatpush1.msra.mxu0 %v131
    %v133 = vand.u32 %v86, 4294901760
    %134 = vmatprep.subr.mxu0 %v133
    %v135 = vand.u32 %v85, 4294901760
    %136 = vmatpush1.msra.mxu0 %v135
    %v137 = vand.u32 %v88, 4294901760
    %138 = vmatprep.subr.mxu0 %v137
    %v139 = vand.u32 %v87, 4294901760
    %140 = vmatpush1.msra.mxu0 %v139
    %v141 = vand.u32 %v90, 4294901760
    %142 = vmatprep.subr.mxu0 %v141
    %v143 = vand.u32 %v89, 4294901760
    %144 = vmatpush1.msra.mxu0 %v143
    %v145 = vand.u32 %v92, 4294901760
    %146 = vmatprep.subr.mxu0 %v145
    %v147 = vand.u32 %v91, 4294901760
    %148 = vmatpush1.msra.mxu0 %v147
    %v149 = vand.u32 %v94, 4294901760
    %150 = vmatprep.subr.mxu0 %v149
    %v151 = vand.u32 %v93, 4294901760
    %152 = vmatpush1.msra.mxu0 %v151
    %v153 = vand.u32 %v96, 4294901760
    %154 = vmatprep.subr.mxu0 %v153
    %v155 = vand.u32 %v95, 4294901760
    %156 = vmatpush1.msra.mxu0 %v155
    %v157 = vand.u32 %v98, 4294901760
    %158 = vmatprep.subr.mxu0 %v157
    %v159 = vand.u32 %v97, 4294901760
    %160 = vmatpush1.msra.mxu0 %v159
    %v161 = vand.u32 %v100, 4294901760
    %162 = vmatprep.subr.mxu0 %v161
    %v163 = vand.u32 %v99, 4294901760
    %164 = vmatpush1.msra.mxu0 %v163
    %v165 = vand.u32 %v102, 4294901760
    %166 = vmatprep.subr.mxu0 %v165
    %v167 = vand.u32 %v101, 4294901760
    %168 = vmatpush1.msra.mxu0 %v167
    %v169 = vand.u32 %v104, 4294901760
    %170 = vmatprep.subr.mxu0 %v169
    %v171 = vand.u32 %v103, 4294901760
    %172 = vmatpush1.msra.mxu0 %v171
    %v173 = vand.u32 %v106, 4294901760
    %174 = vmatprep.subr.mxu0 %v173
    %v175 = vand.u32 %v105, 4294901760
    %176 = vmatpush1.msra.mxu0 %v175
    %v177 = vand.u32 %v108, 4294901760
    %178 = vmatprep.subr.mxu0 %v177
    %v179 = vand.u32 %v107, 4294901760
    %180 = vmatpush1.msra.mxu0 %v179
    %v181 = vand.u32 %v110, 4294901760
    %182 = vmatprep.subr.mxu0 %v181
    %v183 = vand.u32 %v109, 4294901760
    %184 = vmatpush1.msra.mxu0 %v183
    %v185 = vand.u32 %v112, 4294901760
    %186 = vmatprep.subr.mxu0 %v185
    %v187 = vand.u32 %v111, 4294901760
    %188 = vmatpush1.msra.mxu0 %v187
    %189 = vmatprep.subr.mxu0 0.0
    %190 = vmatpush1.msra.mxu0 0.0
    %191 = vmatprep.subr.mxu0 0.0
    %192 = vmatpush1.msra.mxu0 0.0
    %193 = vmatprep.subr.mxu0 0.0
    %194 = vmatpush1.msra.mxu0 0.0
    %195 = vmatprep.subr.mxu0 0.0
    %196 = vmatpush1.msra.mxu0 0.0
    %197 = vmatprep.subr.mxu0 0.0
    %198 = vmatpush1.msra.mxu0 0.0
    %199 = vmatprep.subr.mxu0 0.0
    %200 = vmatpush1.msra.mxu0 0.0
    %201 = vmatprep.subr.mxu0 0.0
    %202 = vmatpush1.msra.mxu0 0.0
    %203 = vmatprep.subr.mxu0 0.0
    %204 = vmatpush1.msra.mxu0 0.0
    %205 = vmatprep.subr.mxu0 0.0
    %206 = vmatpush1.msra.mxu0 0.0
    %207 = vmatprep.subr.mxu0 0.0
    %208 = vmatpush1.msra.mxu0 0.0
    %209 = vmatprep.subr.mxu0 0.0
    %210 = vmatpush1.msra.mxu0 0.0
    %211 = vmatprep.subr.mxu0 0.0
    %212 = vmatpush1.msra.mxu0 0.0
    %213 = vmatprep.subr.mxu0 0.0
    %214 = vmatpush1.msra.mxu0 0.0
    %215 = vmatprep.subr.mxu0 0.0
    %216 = vmatpush1.msra.mxu0 0.0
    %217 = vmatprep.subr.mxu0 0.0
    %218 = vmatpush1.msra.mxu0 0.0
    %219 = vmatprep.subr.mxu0 0.0
    %220 = vmatpush1.msra.mxu0 0.0
    %221 = vmatprep.mubr.f32.mxu0 0.0
    %v222 = vand.u32 %v80, 4294901760
    %v223 = vsub.f32 %v80, %v222
    %v224 = vand.u32 %v223, 4294901760
    %v225 = vsub.f32 %v223, %v224
    %v226 = vand.u32 %v225, 4294901760
    %227 = vmatmul.mubr.f32.gmra.mrb[0].mxu0 %v226
    %v228 = vpop.f32.mrb[0].mxu0
    %v229 = vadd.f32 %v118, %v228
    %v230 = vpop.f32.mrb[0].mxu0
    %v231 = vadd.f32 %v122, %v230
    %232 = vdwg.mxu0
    %v233 = vand.u32 %v82, 4294901760
    %v234 = vsub.f32 %v82, %v233
    %v235 = vand.u32 %v234, 4294901760
    %v236 = vsub.f32 %v234, %v235
    %v237 = vand.u32 %v236, 4294901760
    %238 = vmatprep.subr.mxu0 %v237
    %v239 = vand.u32 %v81, 4294901760
    %v240 = vsub.f32 %v81, %v239
    %v241 = vand.u32 %v240, 4294901760
    %v242 = vsub.f32 %v240, %v241
    %v243 = vand.u32 %v242, 4294901760
    %244 = vmatpush1.msra.mxu0 %v243
    %v245 = vand.u32 %v84, 4294901760
    %v246 = vsub.f32 %v84, %v245
    %v247 = vand.u32 %v246, 4294901760
    %v248 = vsub.f32 %v246, %v247
    %v249 = vand.u32 %v248, 4294901760
    %250 = vmatprep.subr.mxu0 %v249
    %v251 = vand.u32 %v83, 4294901760
    %v252 = vsub.f32 %v83, %v251
    %v253 = vand.u32 %v252, 4294901760
    %v254 = vsub.f32 %v252, %v253
    %v255 = vand.u32 %v254, 4294901760
    %256 = vmatpush1.msra.mxu0 %v255
    %v257 = vand.u32 %v86, 4294901760
    %v258 = vsub.f32 %v86, %v257
    %v259 = vand.u32 %v258, 4294901760
    %v260 = vsub.f32 %v258, %v259
    %v261 = vand.u32 %v260, 4294901760
    %262 = vmatprep.subr.mxu0 %v261
    %v263 = vand.u32 %v85, 4294901760
    %v264 = vsub.f32 %v85, %v263
    %v265 = vand.u32 %v264, 4294901760
    %v266 = vsub.f32 %v264, %v265
    %v267 = vand.u32 %v266, 4294901760
    %268 = vmatpush1.msra.mxu0 %v267
    %v269 = vand.u32 %v88, 4294901760
    %v270 = vsub.f32 %v88, %v269
    %v271 = vand.u32 %v270, 4294901760
    %v272 = vsub.f32 %v270, %v271
    %v273 = vand.u32 %v272, 4294901760
    %274 = vmatprep.subr.mxu0 %v273
    %v275 = vand.u32 %v87, 4294901760
    %v276 = vsub.f32 %v87, %v275
    %v277 = vand.u32 %v276, 4294901760
    %v278 = vsub.f32 %v276, %v277
    %v279 = vand.u32 %v278, 4294901760
    %280 = vmatpush1.msra.mxu0 %v279
    %v281 = vand.u32 %v90, 4294901760
    %v282 = vsub.f32 %v90, %v281
    %v283 = vand.u32 %v282, 4294901760
    %v284 = vsub.f32 %v282, %v283
    %v285 = vand.u32 %v284, 4294901760
    %286 = vmatprep.subr.mxu0 %v285
    %v287 = vand.u32 %v89, 4294901760
    %v288 = vsub.f32 %v89, %v287
    %v289 = vand.u32 %v288, 4294901760
    %v290 = vsub.f32 %v288, %v289
    %v291 = vand.u32 %v290, 4294901760
    %292 = vmatpush1.msra.mxu0 %v291
    %v293 = vand.u32 %v92, 4294901760
    %v294 = vsub.f32 %v92, %v293
    %v295 = vand.u32 %v294, 4294901760
    %v296 = vsub.f32 %v294, %v295
    %v297 = vand.u32 %v296, 4294901760
    %298 = vmatprep.subr.mxu0 %v297
    %v299 = vand.u32 %v91, 4294901760
    %v300 = vsub.f32 %v91, %v299
    %v301 = vand.u32 %v300, 4294901760
    %v302 = vsub.f32 %v300, %v301
    %v303 = vand.u32 %v302, 4294901760
    %304 = vmatpush1.msra.mxu0 %v303
    %v305 = vand.u32 %v94, 4294901760
    %v306 = vsub.f32 %v94, %v305
    %v307 = vand.u32 %v306, 4294901760
    %v308 = vsub.f32 %v306, %v307
    %v309 = vand.u32 %v308, 4294901760
    %310 = vmatprep.subr.mxu0 %v309
    %v311 = vand.u32 %v93, 4294901760
    %v312 = vsub.f32 %v93, %v311
    %v313 = vand.u32 %v312, 4294901760
    %v314 = vsub.f32 %v312, %v313
    %v315 = vand.u32 %v314, 4294901760
    %316 = vmatpush1.msra.mxu0 %v315
    %v317 = vand.u32 %v96, 4294901760
    %v318 = vsub.f32 %v96, %v317
    %v319 = vand.u32 %v318, 4294901760
    %v320 = vsub.f32 %v318, %v319
    %v321 = vand.u32 %v320, 4294901760
    %322 = vmatprep.subr.mxu0 %v321
    %v323 = vand.u32 %v95, 4294901760
    %v324 = vsub.f32 %v95, %v323
    %v325 = vand.u32 %v324, 4294901760
    %v326 = vsub.f32 %v324, %v325
    %v327 = vand.u32 %v326, 4294901760
    %328 = vmatpush1.msra.mxu0 %v327
    %v329 = vand.u32 %v98, 4294901760
    %v330 = vsub.f32 %v98, %v329
    %v331 = vand.u32 %v330, 4294901760
    %v332 = vsub.f32 %v330, %v331
    %v333 = vand.u32 %v332, 4294901760
    %334 = vmatprep.subr.mxu0 %v333
    %v335 = vand.u32 %v97, 4294901760
    %v336 = vsub.f32 %v97, %v335
    %v337 = vand.u32 %v336, 4294901760
    %v338 = vsub.f32 %v336, %v337
    %v339 = vand.u32 %v338, 4294901760
    %340 = vmatpush1.msra.mxu0 %v339
    %v341 = vand.u32 %v100, 4294901760
    %v342 = vsub.f32 %v100, %v341
    %v343 = vand.u32 %v342, 4294901760
    %v344 = vsub.f32 %v342, %v343
    %v345 = vand.u32 %v344, 4294901760
    %346 = vmatprep.subr.mxu0 %v345
    %v347 = vand.u32 %v99, 4294901760
    %v348 = vsub.f32 %v99, %v347
    %v349 = vand.u32 %v348, 4294901760
    %v350 = vsub.f32 %v348, %v349
    %v351 = vand.u32 %v350, 4294901760
    %352 = vmatpush1.msra.mxu0 %v351
    %v353 = vand.u32 %v102, 4294901760
    %v354 = vsub.f32 %v102, %v353
    %v355 = vand.u32 %v354, 4294901760
    %v356 = vsub.f32 %v354, %v355
    %v357 = vand.u32 %v356, 4294901760
    %358 = vmatprep.subr.mxu0 %v357
    %v359 = vand.u32 %v101, 4294901760
    %v360 = vsub.f32 %v101, %v359
    %v361 = vand.u32 %v360, 4294901760
    %v362 = vsub.f32 %v360, %v361
    %v363 = vand.u32 %v362, 4294901760
    %364 = vmatpush1.msra.mxu0 %v363
    %v365 = vand.u32 %v104, 4294901760
    %v366 = vsub.f32 %v104, %v365
    %v367 = vand.u32 %v366, 4294901760
    %v368 = vsub.f32 %v366, %v367
    %v369 = vand.u32 %v368, 4294901760
    %370 = vmatprep.subr.mxu0 %v369
    %v371 = vand.u32 %v103, 4294901760
    %v372 = vsub.f32 %v103, %v371
    %v373 = vand.u32 %v372, 4294901760
    %v374 = vsub.f32 %v372, %v373
    %v375 = vand.u32 %v374, 4294901760
    %376 = vmatpush1.msra.mxu0 %v375
    %v377 = vand.u32 %v106, 4294901760
    %v378 = vsub.f32 %v106, %v377
    %v379 = vand.u32 %v378, 4294901760
    %v380 = vsub.f32 %v378, %v379
    %v381 = vand.u32 %v380, 4294901760
    %382 = vmatprep.subr.mxu0 %v381
    %v383 = vand.u32 %v105, 4294901760
    %v384 = vsub.f32 %v105, %v383
    %v385 = vand.u32 %v384, 4294901760
    %v386 = vsub.f32 %v384, %v385
    %v387 = vand.u32 %v386, 4294901760
    %388 = vmatpush1.msra.mxu0 %v387
    %v389 = vand.u32 %v108, 4294901760
    %v390 = vsub.f32 %v108, %v389
    %v391 = vand.u32 %v390, 4294901760
    %v392 = vsub.f32 %v390, %v391
    %v393 = vand.u32 %v392, 4294901760
    %394 = vmatprep.subr.mxu0 %v393
    %v395 = vand.u32 %v107, 4294901760
    %v396 = vsub.f32 %v107, %v395
    %v397 = vand.u32 %v396, 4294901760
    %v398 = vsub.f32 %v396, %v397
    %v399 = vand.u32 %v398, 4294901760
    %400 = vmatpush1.msra.mxu0 %v399
    %v401 = vand.u32 %v110, 4294901760
    %v402 = vsub.f32 %v110, %v401
    %v403 = vand.u32 %v402, 4294901760
    %v404 = vsub.f32 %v402, %v403
    %v405 = vand.u32 %v404, 4294901760
    %406 = vmatprep.subr.mxu0 %v405
    %v407 = vand.u32 %v109, 4294901760
    %v408 = vsub.f32 %v109, %v407
    %v409 = vand.u32 %v408, 4294901760
    %v410 = vsub.f32 %v408, %v409
    %v411 = vand.u32 %v410, 4294901760
    %412 = vmatpush1.msra.mxu0 %v411
    %v413 = vand.u32 %v112, 4294901760
    %v414 = vsub.f32 %v112, %v413
    %v415 = vand.u32 %v414, 4294901760
    %v416 = vsub.f32 %v414, %v415
    %v417 = vand.u32 %v416, 4294901760
    %418 = vmatprep.subr.mxu0 %v417
    %v419 = vand.u32 %v111, 4294901760
    %v420 = vsub.f32 %v111, %v419
    %v421 = vand.u32 %v420, 4294901760
    %v422 = vsub.f32 %v420, %v421
    %v423 = vand.u32 %v422, 4294901760
    %424 = vmatpush1.msra.mxu0 %v423
    %425 = vmatprep.subr.mxu0 0.0
    %426 = vmatpush1.msra.mxu0 0.0
    %427 = vmatprep.subr.mxu0 0.0
    %428 = vmatpush1.msra.mxu0 0.0
    %429 = vmatprep.subr.mxu0 0.0
    %430 = vmatpush1.msra.mxu0 0.0
    %431 = vmatprep.subr.mxu0 0.0
    %432 = vmatpush1.msra.mxu0 0.0
    %433 = vmatprep.subr.mxu0 0.0
    %434 = vmatpush1.msra.mxu0 0.0
    %435 = vmatprep.subr.mxu0 0.0
    %436 = vmatpush1.msra.mxu0 0.0
    %437 = vmatprep.subr.mxu0 0.0
    %438 = vmatpush1.msra.mxu0 0.0
    %439 = vmatprep.subr.mxu0 0.0
    %440 = vmatpush1.msra.mxu0 0.0
    %441 = vmatprep.subr.mxu0 0.0
    %442 = vmatpush1.msra.mxu0 0.0
    %443 = vmatprep.subr.mxu0 0.0
    %444 = vmatpush1.msra.mxu0 0.0
    %445 = vmatprep.subr.mxu0 0.0
    %446 = vmatpush1.msra.mxu0 0.0
    %447 = vmatprep.subr.mxu0 0.0
    %448 = vmatpush1.msra.mxu0 0.0
    %449 = vmatprep.subr.mxu0 0.0
    %450 = vmatpush1.msra.mxu0 0.0
    %451 = vmatprep.subr.mxu0 0.0
    %452 = vmatpush1.msra.mxu0 0.0
    %453 = vmatprep.subr.mxu0 0.0
    %454 = vmatpush1.msra.mxu0 0.0
    %455 = vmatprep.subr.mxu0 0.0
    %456 = vmatpush1.msra.mxu0 0.0
    %457 = vmatprep.mubr.f32.mxu0 0.0
    %v458 = vand.u32 %v80, 4294901760
    %459 = vmatmul.mubr.f32.gmra.mrb[0].mxu0 %v458
    %v460 = vpop.f32.mrb[0].mxu0
    %v461 = vadd.f32 %v229, %v460
    %v462 = vpop.f32.mrb[0].mxu0
    %v463 = vadd.f32 %v231, %v462
    %464 = vdwg.mxu0
    %v465 = vand.u32 %v82, 4294901760
    %v466 = vsub.f32 %v82, %v465
    %467 = vmatprep.subr.mxu0 %v466
    %v468 = vand.u32 %v81, 4294901760
    %v469 = vsub.f32 %v81, %v468
    %470 = vmatpush1.msra.mxu0 %v469
    %v471 = vand.u32 %v84, 4294901760
    %v472 = vsub.f32 %v84, %v471
    %473 = vmatprep.subr.mxu0 %v472
    %v474 = vand.u32 %v83, 4294901760
    %v475 = vsub.f32 %v83, %v474
    %476 = vmatpush1.msra.mxu0 %v475
    %v477 = vand.u32 %v86, 4294901760
    %v478 = vsub.f32 %v86, %v477
    %479 = vmatprep.subr.mxu0 %v478
    %v480 = vand.u32 %v85, 4294901760
    %v481 = vsub.f32 %v85, %v480
    %482 = vmatpush1.msra.mxu0 %v481
    %v483 = vand.u32 %v88, 4294901760
    %v484 = vsub.f32 %v88, %v483
    %485 = vmatprep.subr.mxu0 %v484
    %v486 = vand.u32 %v87, 4294901760
    %v487 = vsub.f32 %v87, %v486
    %488 = vmatpush1.msra.mxu0 %v487
    %v489 = vand.u32 %v90, 4294901760
    %v490 = vsub.f32 %v90, %v489
    %491 = vmatprep.subr.mxu0 %v490
    %v492 = vand.u32 %v89, 4294901760
    %v493 = vsub.f32 %v89, %v492
    %494 = vmatpush1.msra.mxu0 %v493
    %v495 = vand.u32 %v92, 4294901760
    %v496 = vsub.f32 %v92, %v495
    %497 = vmatprep.subr.mxu0 %v496
    %v498 = vand.u32 %v91, 4294901760
    %v499 = vsub.f32 %v91, %v498
    %500 = vmatpush1.msra.mxu0 %v499
    %v501 = vand.u32 %v94, 4294901760
    %v502 = vsub.f32 %v94, %v501
    %503 = vmatprep.subr.mxu0 %v502
    %v504 = vand.u32 %v93, 4294901760
    %v505 = vsub.f32 %v93, %v504
    %506 = vmatpush1.msra.mxu0 %v505
    %v507 = vand.u32 %v96, 4294901760
    %v508 = vsub.f32 %v96, %v507
    %509 = vmatprep.subr.mxu0 %v508
    %v510 = vand.u32 %v95, 4294901760
    %v511 = vsub.f32 %v95, %v510
    %512 = vmatpush1.msra.mxu0 %v511
    %v513 = vand.u32 %v98, 4294901760
    %v514 = vsub.f32 %v98, %v513
    %515 = vmatprep.subr.mxu0 %v514
    %v516 = vand.u32 %v97, 4294901760
    %v517 = vsub.f32 %v97, %v516
    %518 = vmatpush1.msra.mxu0 %v517
    %v519 = vand.u32 %v100, 4294901760
    %v520 = vsub.f32 %v100, %v519
    %521 = vmatprep.subr.mxu0 %v520
    %v522 = vand.u32 %v99, 4294901760
    %v523 = vsub.f32 %v99, %v522
    %524 = vmatpush1.msra.mxu0 %v523
    %v525 = vand.u32 %v102, 4294901760
    %v526 = vsub.f32 %v102, %v525
    %527 = vmatprep.subr.mxu0 %v526
    %v528 = vand.u32 %v101, 4294901760
    %v529 = vsub.f32 %v101, %v528
    %530 = vmatpush1.msra.mxu0 %v529
    %v531 = vand.u32 %v104, 4294901760
    %v532 = vsub.f32 %v104, %v531
    %533 = vmatprep.subr.mxu0 %v532
    %v534 = vand.u32 %v103, 4294901760
    %v535 = vsub.f32 %v103, %v534
    %536 = vmatpush1.msra.mxu0 %v535
    %v537 = vand.u32 %v106, 4294901760
    %v538 = vsub.f32 %v106, %v537
    %539 = vmatprep.subr.mxu0 %v538
    %v540 = vand.u32 %v105, 4294901760
    %v541 = vsub.f32 %v105, %v540
    %542 = vmatpush1.msra.mxu0 %v541
    %v543 = vand.u32 %v108, 4294901760
    %v544 = vsub.f32 %v108, %v543
    %545 = vmatprep.subr.mxu0 %v544
    %v546 = vand.u32 %v107, 4294901760
    %v547 = vsub.f32 %v107, %v546
    %548 = vmatpush1.msra.mxu0 %v547
    %v549 = vand.u32 %v110, 4294901760
    %v550 = vsub.f32 %v110, %v549
    %551 = vmatprep.subr.mxu0 %v550
    %v552 = vand.u32 %v109, 4294901760
    %v553 = vsub.f32 %v109, %v552
    %554 = vmatpush1.msra.mxu0 %v553
    %v555 = vand.u32 %v112, 4294901760
    %v556 = vsub.f32 %v112, %v555
    %557 = vmatprep.subr.mxu0 %v556
    %v558 = vand.u32 %v111, 4294901760
    %v559 = vsub.f32 %v111, %v558
    %560 = vmatpush1.msra.mxu0 %v559
    %561 = vmatprep.subr.mxu0 0.0
    %562 = vmatpush1.msra.mxu0 0.0
    %563 = vmatprep.subr.mxu0 0.0
    %564 = vmatpush1.msra.mxu0 0.0
    %565 = vmatprep.subr.mxu0 0.0
    %566 = vmatpush1.msra.mxu0 0.0
    %567 = vmatprep.subr.mxu0 0.0
    %568 = vmatpush1.msra.mxu0 0.0
    %569 = vmatprep.subr.mxu0 0.0
    %570 = vmatpush1.msra.mxu0 0.0
    %571 = vmatprep.subr.mxu0 0.0
    %572 = vmatpush1.msra.mxu0 0.0
    %573 = vmatprep.subr.mxu0 0.0
    %574 = vmatpush1.msra.mxu0 0.0
    %575 = vmatprep.subr.mxu0 0.0
    %576 = vmatpush1.msra.mxu0 0.0
    %577 = vmatprep.subr.mxu0 0.0
    %578 = vmatpush1.msra.mxu0 0.0
    %579 = vmatprep.subr.mxu0 0.0
    %580 = vmatpush1.msra.mxu0 0.0
    %581 = vmatprep.subr.mxu0 0.0
    %582 = vmatpush1.msra.mxu0 0.0
    %583 = vmatprep.subr.mxu0 0.0
    %584 = vmatpush1.msra.mxu0 0.0
    %585 = vmatprep.subr.mxu0 0.0
    %586 = vmatpush1.msra.mxu0 0.0
    %587 = vmatprep.subr.mxu0 0.0
    %588 = vmatpush1.msra.mxu0 0.0
    %589 = vmatprep.subr.mxu0 0.0
    %590 = vmatpush1.msra.mxu0 0.0
    %591 = vmatprep.subr.mxu0 0.0
    %592 = vmatpush1.msra.mxu0 0.0
    %593 = vmatprep.mubr.f32.mxu0 0.0
    %v594 = vand.u32 %v80, 4294901760
    %v595 = vsub.f32 %v80, %v594
    %596 = vmatmul.mubr.f32.gmra.mrb[0].mxu0 %v595
    %v597 = vpop.f32.mrb[0].mxu0
    %v598 = vadd.f32 %v461, %v597
    %v599 = vpop.f32.mrb[0].mxu0
    %v600 = vadd.f32 %v463, %v599
    %601 = vdwg.mxu0
    %v602 = vand.u32 %v82, 4294901760
    %603 = vmatprep.subr.mxu0 %v602
    %v604 = vand.u32 %v81, 4294901760
    %605 = vmatpush1.msra.mxu0 %v604
    %v606 = vand.u32 %v84, 4294901760
    %607 = vmatprep.subr.mxu0 %v606
    %v608 = vand.u32 %v83, 4294901760
    %609 = vmatpush1.msra.mxu0 %v608
    %v610 = vand.u32 %v86, 4294901760
    %611 = vmatprep.subr.mxu0 %v610
    %v612 = vand.u32 %v85, 4294901760
    %613 = vmatpush1.msra.mxu0 %v612
    %v614 = vand.u32 %v88, 4294901760
    %615 = vmatprep.subr.mxu0 %v614
    %v616 = vand.u32 %v87, 4294901760
    %617 = vmatpush1.msra.mxu0 %v616
    %v618 = vand.u32 %v90, 4294901760
    %619 = vmatprep.subr.mxu0 %v618
    %v620 = vand.u32 %v89, 4294901760
    %621 = vmatpush1.msra.mxu0 %v620
    %v622 = vand.u32 %v92, 4294901760
    %623 = vmatprep.subr.mxu0 %v622
    %v624 = vand.u32 %v91, 4294901760
    %625 = vmatpush1.msra.mxu0 %v624
    %v626 = vand.u32 %v94, 4294901760
    %627 = vmatprep.subr.mxu0 %v626
    %v628 = vand.u32 %v93, 4294901760
    %629 = vmatpush1.msra.mxu0 %v628
    %v630 = vand.u32 %v96, 4294901760
    %631 = vmatprep.subr.mxu0 %v630
    %v632 = vand.u32 %v95, 4294901760
    %633 = vmatpush1.msra.mxu0 %v632
    %v634 = vand.u32 %v98, 4294901760
    %635 = vmatprep.subr.mxu0 %v634
    %v636 = vand.u32 %v97, 4294901760
    %637 = vmatpush1.msra.mxu0 %v636
    %v638 = vand.u32 %v100, 4294901760
    %639 = vmatprep.subr.mxu0 %v638
    %v640 = vand.u32 %v99, 4294901760
    %641 = vmatpush1.msra.mxu0 %v640
    %v642 = vand.u32 %v102, 4294901760
    %643 = vmatprep.subr.mxu0 %v642
    %v644 = vand.u32 %v101, 4294901760
    %645 = vmatpush1.msra.mxu0 %v644
    %v646 = vand.u32 %v104, 4294901760
    %647 = vmatprep.subr.mxu0 %v646
    %v648 = vand.u32 %v103, 4294901760
    %649 = vmatpush1.msra.mxu0 %v648
    %v650 = vand.u32 %v106, 4294901760
    %651 = vmatprep.subr.mxu0 %v650
    %v652 = vand.u32 %v105, 4294901760
    %653 = vmatpush1.msra.mxu0 %v652
    %v654 = vand.u32 %v108, 4294901760
    %655 = vmatprep.subr.mxu0 %v654
    %v656 = vand.u32 %v107, 4294901760
    %657 = vmatpush1.msra.mxu0 %v656
    %v658 = vand.u32 %v110, 4294901760
    %659 = vmatprep.subr.mxu0 %v658
    %v660 = vand.u32 %v109, 4294901760
    %661 = vmatpush1.msra.mxu0 %v660
    %v662 = vand.u32 %v112, 4294901760
    %663 = vmatprep.subr.mxu0 %v662
    %v664 = vand.u32 %v111, 4294901760
    %665 = vmatpush1.msra.mxu0 %v664
    %666 = vmatprep.subr.mxu0 0.0
    %667 = vmatpush1.msra.mxu0 0.0
    %668 = vmatprep.subr.mxu0 0.0
    %669 = vmatpush1.msra.mxu0 0.0
    %670 = vmatprep.subr.mxu0 0.0
    %671 = vmatpush1.msra.mxu0 0.0
    %672 = vmatprep.subr.mxu0 0.0
    %673 = vmatpush1.msra.mxu0 0.0
    %674 = vmatprep.subr.mxu0 0.0
    %675 = vmatpush1.msra.mxu0 0.0
    %676 = vmatprep.subr.mxu0 0.0
    %677 = vmatpush1.msra.mxu0 0.0
    %678 = vmatprep.subr.mxu0 0.0
    %679 = vmatpush1.msra.mxu0 0.0
    %680 = vmatprep.subr.mxu0 0.0
    %681 = vmatpush1.msra.mxu0 0.0
    %682 = vmatprep.subr.mxu0 0.0
    %683 = vmatpush1.msra.mxu0 0.0
    %684 = vmatprep.subr.mxu0 0.0
    %685 = vmatpush1.msra.mxu0 0.0
    %686 = vmatprep.subr.mxu0 0.0
    %687 = vmatpush1.msra.mxu0 0.0
    %688 = vmatprep.subr.mxu0 0.0
    %689 = vmatpush1.msra.mxu0 0.0
    %690 = vmatprep.subr.mxu0 0.0
    %691 = vmatpush1.msra.mxu0 0.0
    %692 = vmatprep.subr.mxu0 0.0
    %693 = vmatpush1.msra.mxu0 0.0
    %694 = vmatprep.subr.mxu0 0.0
    %695 = vmatpush1.msra.mxu0 0.0
    %696 = vmatprep.subr.mxu0 0.0
    %697 = vmatpush1.msra.mxu0 0.0
    %698 = vmatprep.mubr.f32.mxu0 0.0
    %v699 = vand.u32 %v80, 4294901760
    %v700 = vsub.f32 %v80, %v699
    %v701 = vand.u32 %v700, 4294901760
    %702 = vmatmul.mubr.f32.gmra.mrb[0].mxu0 %v701
    %v703 = vpop.f32.mrb[0].mxu0
    %v704 = vadd.f32 %v598, %v703
    %v705 = vpop.f32.mrb[0].mxu0
    %v706 = vadd.f32 %v600, %v705
    %707 = vdwg.mxu0
    %v708 = vand.u32 %v82, 4294901760
    %v709 = vsub.f32 %v82, %v708
    %v710 = vand.u32 %v709, 4294901760
    %711 = vmatprep.subr.mxu0 %v710
    %v712 = vand.u32 %v81, 4294901760
    %v713 = vsub.f32 %v81, %v712
    %v714 = vand.u32 %v713, 4294901760
    %715 = vmatpush1.msra.mxu0 %v714
    %v716 = vand.u32 %v84, 4294901760
    %v717 = vsub.f32 %v84, %v716
    %v718 = vand.u32 %v717, 4294901760
    %719 = vmatprep.subr.mxu0 %v718
    %v720 = vand.u32 %v83, 4294901760
    %v721 = vsub.f32 %v83, %v720
    %v722 = vand.u32 %v721, 4294901760
    %723 = vmatpush1.msra.mxu0 %v722
    %v724 = vand.u32 %v86, 4294901760
    %v725 = vsub.f32 %v86, %v724
    %v726 = vand.u32 %v725, 4294901760
    %727 = vmatprep.subr.mxu0 %v726
    %v728 = vand.u32 %v85, 4294901760
    %v729 = vsub.f32 %v85, %v728
    %v730 = vand.u32 %v729, 4294901760
    %731 = vmatpush1.msra.mxu0 %v730
    %v732 = vand.u32 %v88, 4294901760
    %v733 = vsub.f32 %v88, %v732
    %v734 = vand.u32 %v733, 4294901760
    %735 = vmatprep.subr.mxu0 %v734
    %v736 = vand.u32 %v87, 4294901760
    %v737 = vsub.f32 %v87, %v736
    %v738 = vand.u32 %v737, 4294901760
    %739 = vmatpush1.msra.mxu0 %v738
    %v740 = vand.u32 %v90, 4294901760
    %v741 = vsub.f32 %v90, %v740
    %v742 = vand.u32 %v741, 4294901760
    %743 = vmatprep.subr.mxu0 %v742
    %v744 = vand.u32 %v89, 4294901760
    %v745 = vsub.f32 %v89, %v744
    %v746 = vand.u32 %v745, 4294901760
    %747 = vmatpush1.msra.mxu0 %v746
    %v748 = vand.u32 %v92, 4294901760
    %v749 = vsub.f32 %v92, %v748
    %v750 = vand.u32 %v749, 4294901760
    %751 = vmatprep.subr.mxu0 %v750
    %v752 = vand.u32 %v91, 4294901760
    %v753 = vsub.f32 %v91, %v752
    %v754 = vand.u32 %v753, 4294901760
    %755 = vmatpush1.msra.mxu0 %v754
    %v756 = vand.u32 %v94, 4294901760
    %v757 = vsub.f32 %v94, %v756
    %v758 = vand.u32 %v757, 4294901760
    %759 = vmatprep.subr.mxu0 %v758
    %v760 = vand.u32 %v93, 4294901760
    %v761 = vsub.f32 %v93, %v760
    %v762 = vand.u32 %v761, 4294901760
    %763 = vmatpush1.msra.mxu0 %v762
    %v764 = vand.u32 %v96, 4294901760
    %v765 = vsub.f32 %v96, %v764
    %v766 = vand.u32 %v765, 4294901760
    %767 = vmatprep.subr.mxu0 %v766
    %v768 = vand.u32 %v95, 4294901760
    %v769 = vsub.f32 %v95, %v768
    %v770 = vand.u32 %v769, 4294901760
    %771 = vmatpush1.msra.mxu0 %v770
    %v772 = vand.u32 %v98, 4294901760
    %v773 = vsub.f32 %v98, %v772
    %v774 = vand.u32 %v773, 4294901760
    %775 = vmatprep.subr.mxu0 %v774
    %v776 = vand.u32 %v97, 4294901760
    %v777 = vsub.f32 %v97, %v776
    %v778 = vand.u32 %v777, 4294901760
    %779 = vmatpush1.msra.mxu0 %v778
    %v780 = vand.u32 %v100, 4294901760
    %v781 = vsub.f32 %v100, %v780
    %v782 = vand.u32 %v781, 4294901760
    %783 = vmatprep.subr.mxu0 %v782
    %v784 = vand.u32 %v99, 4294901760
    %v785 = vsub.f32 %v99, %v784
    %v786 = vand.u32 %v785, 4294901760
    %787 = vmatpush1.msra.mxu0 %v786
    %v788 = vand.u32 %v102, 4294901760
    %v789 = vsub.f32 %v102, %v788
    %v790 = vand.u32 %v789, 4294901760
    %791 = vmatprep.subr.mxu0 %v790
    %v792 = vand.u32 %v101, 4294901760
    %v793 = vsub.f32 %v101, %v792
    %v794 = vand.u32 %v793, 4294901760
    %795 = vmatpush1.msra.mxu0 %v794
    %v796 = vand.u32 %v104, 4294901760
    %v797 = vsub.f32 %v104, %v796
    %v798 = vand.u32 %v797, 4294901760
    %799 = vmatprep.subr.mxu0 %v798
    %v800 = vand.u32 %v103, 4294901760
    %v801 = vsub.f32 %v103, %v800
    %v802 = vand.u32 %v801, 4294901760
    %803 = vmatpush1.msra.mxu0 %v802
    %v804 = vand.u32 %v106, 4294901760
    %v805 = vsub.f32 %v106, %v804
    %v806 = vand.u32 %v805, 4294901760
    %807 = vmatprep.subr.mxu0 %v806
    %v808 = vand.u32 %v105, 4294901760
    %v809 = vsub.f32 %v105, %v808
    %v810 = vand.u32 %v809, 4294901760
    %811 = vmatpush1.msra.mxu0 %v810
    %v812 = vand.u32 %v108, 4294901760
    %v813 = vsub.f32 %v108, %v812
    %v814 = vand.u32 %v813, 4294901760
    %815 = vmatprep.subr.mxu0 %v814
    %v816 = vand.u32 %v107, 4294901760
    %v817 = vsub.f32 %v107, %v816
    %v818 = vand.u32 %v817, 4294901760
    %819 = vmatpush1.msra.mxu0 %v818
    %v820 = vand.u32 %v110, 4294901760
    %v821 = vsub.f32 %v110, %v820
    %v822 = vand.u32 %v821, 4294901760
    %823 = vmatprep.subr.mxu0 %v822
    %v824 = vand.u32 %v109, 4294901760
    %v825 = vsub.f32 %v109, %v824
    %v826 = vand.u32 %v825, 4294901760
    %827 = vmatpush1.msra.mxu0 %v826
    %v828 = vand.u32 %v112, 4294901760
    %v829 = vsub.f32 %v112, %v828
    %v830 = vand.u32 %v829, 4294901760
    %831 = vmatprep.subr.mxu0 %v830
    %v832 = vand.u32 %v111, 4294901760
    %v833 = vsub.f32 %v111, %v832
    %v834 = vand.u32 %v833, 4294901760
    %835 = vmatpush1.msra.mxu0 %v834
    %836 = vmatprep.subr.mxu0 0.0
    %837 = vmatpush1.msra.mxu0 0.0
    %838 = vmatprep.subr.mxu0 0.0
    %839 = vmatpush1.msra.mxu0 0.0
    %840 = vmatprep.subr.mxu0 0.0
    %841 = vmatpush1.msra.mxu0 0.0
    %842 = vmatprep.subr.mxu0 0.0
    %843 = vmatpush1.msra.mxu0 0.0
    %844 = vmatprep.subr.mxu0 0.0
    %845 = vmatpush1.msra.mxu0 0.0
    %846 = vmatprep.subr.mxu0 0.0
    %847 = vmatpush1.msra.mxu0 0.0
    %848 = vmatprep.subr.mxu0 0.0
    %849 = vmatpush1.msra.mxu0 0.0
    %850 = vmatprep.subr.mxu0 0.0
    %851 = vmatpush1.msra.mxu0 0.0
    %852 = vmatprep.subr.mxu0 0.0
    %853 = vmatpush1.msra.mxu0 0.0
    %854 = vmatprep.subr.mxu0 0.0
    %855 = vmatpush1.msra.mxu0 0.0
    %856 = vmatprep.subr.mxu0 0.0
    %857 = vmatpush1.msra.mxu0 0.0
    %858 = vmatprep.subr.mxu0 0.0
    %859 = vmatpush1.msra.mxu0 0.0
    %860 = vmatprep.subr.mxu0 0.0
    %861 = vmatpush1.msra.mxu0 0.0
    %862 = vmatprep.subr.mxu0 0.0
    %863 = vmatpush1.msra.mxu0 0.0
    %864 = vmatprep.subr.mxu0 0.0
    %865 = vmatpush1.msra.mxu0 0.0
    %866 = vmatprep.subr.mxu0 0.0
    %867 = vmatpush1.msra.mxu0 0.0
    %868 = vmatprep.mubr.f32.mxu0 0.0
    %v869 = vand.u32 %v80, 4294901760
    %870 = vmatmul.mubr.f32.gmra.mrb[0].mxu0 %v869
    %v871 = vpop.f32.mrb[0].mxu0
    %v872 = vadd.f32 %v704, %v871
    %v873 = vpop.f32.mrb[0].mxu0
    %v874 = vadd.f32 %v706, %v873
    %875 = vdwg.mxu0
    %v876 = vand.u32 %v82, 4294901760
    %877 = vmatprep.subr.mxu0 %v876
    %v878 = vand.u32 %v81, 4294901760
    %879 = vmatpush1.msra.mxu0 %v878
    %v880 = vand.u32 %v84, 4294901760
    %881 = vmatprep.subr.mxu0 %v880
    %v882 = vand.u32 %v83, 4294901760
    %883 = vmatpush1.msra.mxu0 %v882
    %v884 = vand.u32 %v86, 4294901760
    %885 = vmatprep.subr.mxu0 %v884
    %v886 = vand.u32 %v85, 4294901760
    %887 = vmatpush1.msra.mxu0 %v886
    %v888 = vand.u32 %v88, 4294901760
    %889 = vmatprep.subr.mxu0 %v888
    %v890 = vand.u32 %v87, 4294901760
    %891 = vmatpush1.msra.mxu0 %v890
    %v892 = vand.u32 %v90, 4294901760
    %893 = vmatprep.subr.mxu0 %v892
    %v894 = vand.u32 %v89, 4294901760
    %895 = vmatpush1.msra.mxu0 %v894
    %v896 = vand.u32 %v92, 4294901760
    %897 = vmatprep.subr.mxu0 %v896
    %v898 = vand.u32 %v91, 4294901760
    %899 = vmatpush1.msra.mxu0 %v898
    %v900 = vand.u32 %v94, 4294901760
    %901 = vmatprep.subr.mxu0 %v900
    %v902 = vand.u32 %v93, 4294901760
    %903 = vmatpush1.msra.mxu0 %v902
    %v904 = vand.u32 %v96, 4294901760
    %905 = vmatprep.subr.mxu0 %v904
    %v906 = vand.u32 %v95, 4294901760
    %907 = vmatpush1.msra.mxu0 %v906
    %v908 = vand.u32 %v98, 4294901760
    %909 = vmatprep.subr.mxu0 %v908
    %v910 = vand.u32 %v97, 4294901760
    %911 = vmatpush1.msra.mxu0 %v910
    %v912 = vand.u32 %v100, 4294901760
    %913 = vmatprep.subr.mxu0 %v912
    %v914 = vand.u32 %v99, 4294901760
    %915 = vmatpush1.msra.mxu0 %v914
    %v916 = vand.u32 %v102, 4294901760
    %917 = vmatprep.subr.mxu0 %v916
    %v918 = vand.u32 %v101, 4294901760
    %919 = vmatpush1.msra.mxu0 %v918
    %v920 = vand.u32 %v104, 4294901760
    %921 = vmatprep.subr.mxu0 %v920
    %v922 = vand.u32 %v103, 4294901760
    %923 = vmatpush1.msra.mxu0 %v922
    %v924 = vand.u32 %v106, 4294901760
    %925 = vmatprep.subr.mxu0 %v924
    %v926 = vand.u32 %v105, 4294901760
    %927 = vmatpush1.msra.mxu0 %v926
    %v928 = vand.u32 %v108, 4294901760
    %929 = vmatprep.subr.mxu0 %v928
    %v930 = vand.u32 %v107, 4294901760
    %931 = vmatpush1.msra.mxu0 %v930
    %v932 = vand.u32 %v110, 4294901760
    %933 = vmatprep.subr.mxu0 %v932
    %v934 = vand.u32 %v109, 4294901760
    %935 = vmatpush1.msra.mxu0 %v934
    %v936 = vand.u32 %v112, 4294901760
    %937 = vmatprep.subr.mxu0 %v936
    %v938 = vand.u32 %v111, 4294901760
    %939 = vmatpush1.msra.mxu0 %v938
    %940 = vmatprep.subr.mxu0 0.0
    %941 = vmatpush1.msra.mxu0 0.0
    %942 = vmatprep.subr.mxu0 0.0
    %943 = vmatpush1.msra.mxu0 0.0
    %944 = vmatprep.subr.mxu0 0.0
    %945 = vmatpush1.msra.mxu0 0.0
    %946 = vmatprep.subr.mxu0 0.0
    %947 = vmatpush1.msra.mxu0 0.0
    %948 = vmatprep.subr.mxu0 0.0
    %949 = vmatpush1.msra.mxu0 0.0
    %950 = vmatprep.subr.mxu0 0.0
    %951 = vmatpush1.msra.mxu0 0.0
    %952 = vmatprep.subr.mxu0 0.0
    %953 = vmatpush1.msra.mxu0 0.0
    %954 = vmatprep.subr.mxu0 0.0
    %955 = vmatpush1.msra.mxu0 0.0
    %956 = vmatprep.subr.mxu0 0.0
    %957 = vmatpush1.msra.mxu0 0.0
    %958 = vmatprep.subr.mxu0 0.0
    %959 = vmatpush1.msra.mxu0 0.0
    %960 = vmatprep.subr.mxu0 0.0
    %961 = vmatpush1.msra.mxu0 0.0
    %962 = vmatprep.subr.mxu0 0.0
    %963 = vmatpush1.msra.mxu0 0.0
    %964 = vmatprep.subr.mxu0 0.0
    %965 = vmatpush1.msra.mxu0 0.0
    %966 = vmatprep.subr.mxu0 0.0
    %967 = vmatpush1.msra.mxu0 0.0
    %968 = vmatprep.subr.mxu0 0.0
    %969 = vmatpush1.msra.mxu0 0.0
    %970 = vmatprep.subr.mxu0 0.0
    %971 = vmatpush1.msra.mxu0 0.0
    %972 = vmatprep.mubr.f32.mxu0 0.0
    %v973 = vand.u32 %v80, 4294901760
    %974 = vmatmul.mubr.f32.gmra.mrb[0].mxu0 %v973
    %v975 = vpop.f32.mrb[0].mxu0
    %v976 = vadd.f32 %v872, %v975
    %v977 = vpop.f32.mrb[0].mxu0
    %v978 = vadd.f32 %v874, %v977
    %979 = vdwg.mxu0
    %v980 = vmax.f32 %v976, 0.0
    %v981 = vmax.f32 %v978, 0.0
    %v982 = vld [vmem:[#allocation7] sm:$0xff]
    %v983 = vld [vmem:[#allocation7 + $0x8] sm:$0xff]
    %v984 = vld [vmem:[#allocation7 + $0x10] sm:$0xff]
    %v985 = vld [vmem:[#allocation7 + $0x18] sm:$0xff]
    %v986 = vld [vmem:[#allocation7 + $0x20] sm:$0xff]
    %v987 = vld [vmem:[#allocation7 + $0x28] sm:$0xff]
    %v988 = vld [vmem:[#allocation7 + $0x30] sm:$0xff]
    %v989 = vld [vmem:[#allocation7 + $0x38] sm:$0xff]
    %v990 = vld [vmem:[#allocation7 + $0x40] sm:$0xff]
    %v991 = vld [vmem:[#allocation7 + $0x48] sm:$0xff]
    %v992 = vld [vmem:[#allocation7 + $0x50] sm:$0xff]
    %v993 = vld [vmem:[#allocation7 + $0x58] sm:$0xff]
    %v994 = vld [vmem:[#allocation7 + $0x60] sm:$0xff]
    %v995 = vld [vmem:[#allocation7 + $0x68] sm:$0xff]
    %v996 = vld [vmem:[#allocation7 + $0x70] sm:$0xff]
    %v997 = vld [vmem:[#allocation7 + $0x78] sm:$0xff]
    %v998 = vld [vmem:[#allocation7 + $0x80] sm:$0xff]
    %v999 = vld [vmem:[#allocation7 + $0x88] sm:$0xff]
    %v1000 = vld [vmem:[#allocation7 + $0x90] sm:$0xff]
    %v1001 = vld [vmem:[#allocation7 + $0x98] sm:$0xff]
    %v1002 = vld [vmem:[#allocation7 + $0xa0] sm:$0xff]
    %v1003 = vld [vmem:[#allocation7 + $0xa8] sm:$0xff]
    %v1004 = vld [vmem:[#allocation7 + $0xb0] sm:$0xff]
    %v1005 = vld [vmem:[#allocation7 + $0xb8] sm:$0xff]
    %v1006 = vld [vmem:[#allocation7 + $0xc0] sm:$0xff]
    %v1007 = vld [vmem:[#allocation7 + $0xc8] sm:$0xff]
    %v1008 = vld [vmem:[#allocation7 + $0xd0] sm:$0xff]
    %v1009 = vld [vmem:[#allocation7 + $0xd8] sm:$0xff]
    %v1010 = vld [vmem:[#allocation7 + $0xe0] sm:$0xff]
    %v1011 = vld [vmem:[#allocation7 + $0xe8] sm:$0xff]
    %v1012 = vld [vmem:[#allocation7 + $0xf0] sm:$0xff]
    %v1013 = vld [vmem:[#allocation7 + $0xf8] sm:$0xff]
    %v1014 = vld [vmem:[%s4] sm:$0x1]
    %v1016 = vlaneseq
    %v1017 = vshrl.u32 %v1016, 7
    %v1018 = vsub.s32 0, %v1017
    %v1019 = vrot.slane %v1014, %v1018
    %1021 = vmatprep.subr.mxu0 0.0
    %v1022 = vand.u32 %v982, 4294901760
    %1023 = vmatpush1.msra.mxu0 %v1022
    %1024 = vmatprep.subr.mxu0 0.0
    %v1025 = vand.u32 %v983, 4294901760
    %1026 = vmatpush1.msra.mxu0 %v1025
    %1027 = vmatprep.subr.mxu0 0.0
    %v1028 = vand.u32 %v984, 4294901760
    %1029 = vmatpush1.msra.mxu0 %v1028
    %1030 = vmatprep.subr.mxu0 0.0
    %v1031 = vand.u32 %v985, 4294901760
    %1032 = vmatpush1.msra.mxu0 %v1031
    %1033 = vmatprep.subr.mxu0 0.0
    %v1034 = vand.u32 %v986, 4294901760
    %1035 = vmatpush1.msra.mxu0 %v1034
    %1036 = vmatprep.subr.mxu0 0.0
    %v1037 = vand.u32 %v987, 4294901760
    %1038 = vmatpush1.msra.mxu0 %v1037
    %1039 = vmatprep.subr.mxu0 0.0
    %v1040 = vand.u32 %v988, 4294901760
    %1041 = vmatpush1.msra.mxu0 %v1040
    %1042 = vmatprep.subr.mxu0 0.0
    %v1043 = vand.u32 %v989, 4294901760
    %1044 = vmatpush1.msra.mxu0 %v1043
    %1045 = vmatprep.subr.mxu0 0.0
    %v1046 = vand.u32 %v990, 4294901760
    %1047 = vmatpush1.msra.mxu0 %v1046
    %1048 = vmatprep.subr.mxu0 0.0
    %v1049 = vand.u32 %v991, 4294901760
    %1050 = vmatpush1.msra.mxu0 %v1049
    %1051 = vmatprep.subr.mxu0 0.0
    %v1052 = vand.u32 %v992, 4294901760
    %1053 = vmatpush1.msra.mxu0 %v1052
    %1054 = vmatprep.subr.mxu0 0.0
    %v1055 = vand.u32 %v993, 4294901760
    %1056 = vmatpush1.msra.mxu0 %v1055
    %1057 = vmatprep.subr.mxu0 0.0
    %v1058 = vand.u32 %v994, 4294901760
    %1059 = vmatpush1.msra.mxu0 %v1058
    %1060 = vmatprep.subr.mxu0 0.0
    %v1061 = vand.u32 %v995, 4294901760
    %1062 = vmatpush1.msra.mxu0 %v1061
    %1063 = vmatprep.subr.mxu0 0.0
    %v1064 = vand.u32 %v996, 4294901760
    %1065 = vmatpush1.msra.mxu0 %v1064
    %1066 = vmatprep.subr.mxu0 0.0
    %v1067 = vand.u32 %v997, 4294901760
    %1068 = vmatpush1.msra.mxu0 %v1067
    %1069 = vmatprep.subr.mxu0 0.0
    %v1070 = vand.u32 %v998, 4294901760
    %1071 = vmatpush1.msra.mxu0 %v1070
    %1072 = vmatprep.subr.mxu0 0.0
    %v1073 = vand.u32 %v999, 4294901760
    %1074 = vmatpush1.msra.mxu0 %v1073
    %1075 = vmatprep.subr.mxu0 0.0
    %v1076 = vand.u32 %v1000, 4294901760
    %1077 = vmatpush1.msra.mxu0 %v1076
    %1078 = vmatprep.subr.mxu0 0.0
    %v1079 = vand.u32 %v1001, 4294901760
    %1080 = vmatpush1.msra.mxu0 %v1079
    %1081 = vmatprep.subr.mxu0 0.0
    %v1082 = vand.u32 %v1002, 4294901760
    %1083 = vmatpush1.msra.mxu0 %v1082
    %1084 = vmatprep.subr.mxu0 0.0
    %v1085 = vand.u32 %v1003, 4294901760
    %1086 = vmatpush1.msra.mxu0 %v1085
    %1087 = vmatprep.subr.mxu0 0.0
    %v1088 = vand.u32 %v1004, 4294901760
    %1089 = vmatpush1.msra.mxu0 %v1088
    %1090 = vmatprep.subr.mxu0 0.0
    %v1091 = vand.u32 %v1005, 4294901760
    %1092 = vmatpush1.msra.mxu0 %v1091
    %1093 = vmatprep.subr.mxu0 0.0
    %v1094 = vand.u32 %v1006, 4294901760
    %1095 = vmatpush1.msra.mxu0 %v1094
    %1096 = vmatprep.subr.mxu0 0.0
    %v1097 = vand.u32 %v1007, 4294901760
    %1098 = vmatpush1.msra.mxu0 %v1097
    %1099 = vmatprep.subr.mxu0 0.0
    %v1100 = vand.u32 %v1008, 4294901760
    %1101 = vmatpush1.msra.mxu0 %v1100
    %1102 = vmatprep.subr.mxu0 0.0
    %v1103 = vand.u32 %v1009, 4294901760
    %1104 = vmatpush1.msra.mxu0 %v1103
    %1105 = vmatprep.subr.mxu0 0.0
    %v1106 = vand.u32 %v1010, 4294901760
    %1107 = vmatpush1.msra.mxu0 %v1106
    %1108 = vmatprep.subr.mxu0 0.0
    %v1109 = vand.u32 %v1011, 4294901760
    %1110 = vmatpush1.msra.mxu0 %v1109
    %1111 = vmatprep.subr.mxu0 0.0
    %v1112 = vand.u32 %v1012, 4294901760
    %1113 = vmatpush1.msra.mxu0 %v1112
    %1114 = vmatprep.subr.mxu0 0.0
    %v1115 = vand.u32 %v1013, 4294901760
    %1116 = vmatpush1.msra.mxu0 %v1115
    %v1117 = vand.u32 %v981, 4294901760
    %v1118 = vsub.f32 %v981, %v1117
    %v1119 = vand.u32 %v1118, 4294901760
    %v1120 = vsub.f32 %v1118, %v1119
    %v1121 = vand.u32 %v1120, 4294901760
    %1122 = vmatprep.mubr.f32.mxu0 %v1121
    %v1123 = vand.u32 %v980, 4294901760
    %v1124 = vsub.f32 %v980, %v1123
    %v1125 = vand.u32 %v1124, 4294901760
    %v1126 = vsub.f32 %v1124, %v1125
    %v1127 = vand.u32 %v1126, 4294901760
    %1128 = vmatmul.mubr.f32.gmra.mrb[0].mxu0 %v1127
    %v1129 = vpop.f32.mrb[0].mxu0
    %v1130 = vadd.f32 %v1019, %v1129
    %v1131 = vpop.f32.mrb[0].mxu0
    %1132 = vdwg.mxu0
    %1133 = vmatprep.subr.mxu0 0.0
    %v1134 = vand.u32 %v982, 4294901760
    %v1135 = vsub.f32 %v982, %v1134
    %v1136 = vand.u32 %v1135, 4294901760
    %v1137 = vsub.f32 %v1135, %v1136
    %v1138 = vand.u32 %v1137, 4294901760
    %1139 = vmatpush1.msra.mxu0 %v1138
    %1140 = vmatprep.subr.mxu0 0.0
    %v1141 = vand.u32 %v983, 4294901760
    %v1142 = vsub.f32 %v983, %v1141
    %v1143 = vand.u32 %v1142, 4294901760
    %v1144 = vsub.f32 %v1142, %v1143
    %v1145 = vand.u32 %v1144, 4294901760
    %1146 = vmatpush1.msra.mxu0 %v1145
    %1147 = vmatprep.subr.mxu0 0.0
    %v1148 = vand.u32 %v984, 4294901760
    %v1149 = vsub.f32 %v984, %v1148
    %v1150 = vand.u32 %v1149, 4294901760
    %v1151 = vsub.f32 %v1149, %v1150
    %v1152 = vand.u32 %v1151, 4294901760
    %1153 = vmatpush1.msra.mxu0 %v1152
    %1154 = vmatprep.subr.mxu0 0.0
    %v1155 = vand.u32 %v985, 4294901760
    %v1156 = vsub.f32 %v985, %v1155
    %v1157 = vand.u32 %v1156, 4294901760
    %v1158 = vsub.f32 %v1156, %v1157
    %v1159 = vand.u32 %v1158, 4294901760
    %1160 = vmatpush1.msra.mxu0 %v1159
    %1161 = vmatprep.subr.mxu0 0.0
    %v1162 = vand.u32 %v986, 4294901760
    %v1163 = vsub.f32 %v986, %v1162
    %v1164 = vand.u32 %v1163, 4294901760
    %v1165 = vsub.f32 %v1163, %v1164
    %v1166 = vand.u32 %v1165, 4294901760
    %1167 = vmatpush1.msra.mxu0 %v1166
    %1168 = vmatprep.subr.mxu0 0.0
    %v1169 = vand.u32 %v987, 4294901760
    %v1170 = vsub.f32 %v987, %v1169
    %v1171 = vand.u32 %v1170, 4294901760
    %v1172 = vsub.f32 %v1170, %v1171
    %v1173 = vand.u32 %v1172, 4294901760
    %1174 = vmatpush1.msra.mxu0 %v1173
    %1175 = vmatprep.subr.mxu0 0.0
    %v1176 = vand.u32 %v988, 4294901760
    %v1177 = vsub.f32 %v988, %v1176
    %v1178 = vand.u32 %v1177, 4294901760
    %v1179 = vsub.f32 %v1177, %v1178
    %v1180 = vand.u32 %v1179, 4294901760
    %1181 = vmatpush1.msra.mxu0 %v1180
    %1182 = vmatprep.subr.mxu0 0.0
    %v1183 = vand.u32 %v989, 4294901760
    %v1184 = vsub.f32 %v989, %v1183
    %v1185 = vand.u32 %v1184, 4294901760
    %v1186 = vsub.f32 %v1184, %v1185
    %v1187 = vand.u32 %v1186, 4294901760
    %1188 = vmatpush1.msra.mxu0 %v1187
    %1189 = vmatprep.subr.mxu0 0.0
    %v1190 = vand.u32 %v990, 4294901760
    %v1191 = vsub.f32 %v990, %v1190
    %v1192 = vand.u32 %v1191, 4294901760
    %v1193 = vsub.f32 %v1191, %v1192
    %v1194 = vand.u32 %v1193, 4294901760
    %1195 = vmatpush1.msra.mxu0 %v1194
    %1196 = vmatprep.subr.mxu0 0.0
    %v1197 = vand.u32 %v991, 4294901760
    %v1198 = vsub.f32 %v991, %v1197
    %v1199 = vand.u32 %v1198, 4294901760
    %v1200 = vsub.f32 %v1198, %v1199
    %v1201 = vand.u32 %v1200, 4294901760
    %1202 = vmatpush1.msra.mxu0 %v1201
    %1203 = vmatprep.subr.mxu0 0.0
    %v1204 = vand.u32 %v992, 4294901760
    %v1205 = vsub.f32 %v992, %v1204
    %v1206 = vand.u32 %v1205, 4294901760
    %v1207 = vsub.f32 %v1205, %v1206
    %v1208 = vand.u32 %v1207, 4294901760
    %1209 = vmatpush1.msra.mxu0 %v1208
    %1210 = vmatprep.subr.mxu0 0.0
    %v1211 = vand.u32 %v993, 4294901760
    %v1212 = vsub.f32 %v993, %v1211
    %v1213 = vand.u32 %v1212, 4294901760
    %v1214 = vsub.f32 %v1212, %v1213
    %v1215 = vand.u32 %v1214, 4294901760
    %1216 = vmatpush1.msra.mxu0 %v1215
    %1217 = vmatprep.subr.mxu0 0.0
    %v1218 = vand.u32 %v994, 4294901760
    %v1219 = vsub.f32 %v994, %v1218
    %v1220 = vand.u32 %v1219, 4294901760
    %v1221 = vsub.f32 %v1219, %v1220
    %v1222 = vand.u32 %v1221, 4294901760
    %1223 = vmatpush1.msra.mxu0 %v1222
    %1224 = vmatprep.subr.mxu0 0.0
    %v1225 = vand.u32 %v995, 4294901760
    %v1226 = vsub.f32 %v995, %v1225
    %v1227 = vand.u32 %v1226, 4294901760
    %v1228 = vsub.f32 %v1226, %v1227
    %v1229 = vand.u32 %v1228, 4294901760
    %1230 = vmatpush1.msra.mxu0 %v1229
    %1231 = vmatprep.subr.mxu0 0.0
    %v1232 = vand.u32 %v996, 4294901760
    %v1233 = vsub.f32 %v996, %v1232
    %v1234 = vand.u32 %v1233, 4294901760
    %v1235 = vsub.f32 %v1233, %v1234
    %v1236 = vand.u32 %v1235, 4294901760
    %1237 = vmatpush1.msra.mxu0 %v1236
    %1238 = vmatprep.subr.mxu0 0.0
    %v1239 = vand.u32 %v997, 4294901760
    %v1240 = vsub.f32 %v997, %v1239
    %v1241 = vand.u32 %v1240, 4294901760
    %v1242 = vsub.f32 %v1240, %v1241
    %v1243 = vand.u32 %v1242, 4294901760
    %1244 = vmatpush1.msra.mxu0 %v1243
    %1245 = vmatprep.subr.mxu0 0.0
    %v1246 = vand.u32 %v998, 4294901760
    %v1247 = vsub.f32 %v998, %v1246
    %v1248 = vand.u32 %v1247, 4294901760
    %v1249 = vsub.f32 %v1247, %v1248
    %v1250 = vand.u32 %v1249, 4294901760
    %1251 = vmatpush1.msra.mxu0 %v1250
    %1252 = vmatprep.subr.mxu0 0.0
    %v1253 = vand.u32 %v999, 4294901760
    %v1254 = vsub.f32 %v999, %v1253
    %v1255 = vand.u32 %v1254, 4294901760
    %v1256 = vsub.f32 %v1254, %v1255
    %v1257 = vand.u32 %v1256, 4294901760
    %1258 = vmatpush1.msra.mxu0 %v1257
    %1259 = vmatprep.subr.mxu0 0.0
    %v1260 = vand.u32 %v1000, 4294901760
    %v1261 = vsub.f32 %v1000, %v1260
    %v1262 = vand.u32 %v1261, 4294901760
    %v1263 = vsub.f32 %v1261, %v1262
    %v1264 = vand.u32 %v1263, 4294901760
    %1265 = vmatpush1.msra.mxu0 %v1264
    %1266 = vmatprep.subr.mxu0 0.0
    %v1267 = vand.u32 %v1001, 4294901760
    %v1268 = vsub.f32 %v1001, %v1267
    %v1269 = vand.u32 %v1268, 4294901760
    %v1270 = vsub.f32 %v1268, %v1269
    %v1271 = vand.u32 %v1270, 4294901760
    %1272 = vmatpush1.msra.mxu0 %v1271
    %1273 = vmatprep.subr.mxu0 0.0
    %v1274 = vand.u32 %v1002, 4294901760
    %v1275 = vsub.f32 %v1002, %v1274
    %v1276 = vand.u32 %v1275, 4294901760
    %v1277 = vsub.f32 %v1275, %v1276
    %v1278 = vand.u32 %v1277, 4294901760
    %1279 = vmatpush1.msra.mxu0 %v1278
    %1280 = vmatprep.subr.mxu0 0.0
    %v1281 = vand.u32 %v1003, 4294901760
    %v1282 = vsub.f32 %v1003, %v1281
    %v1283 = vand.u32 %v1282, 4294901760
    %v1284 = vsub.f32 %v1282, %v1283
    %v1285 = vand.u32 %v1284, 4294901760
    %1286 = vmatpush1.msra.mxu0 %v1285
    %1287 = vmatprep.subr.mxu0 0.0
    %v1288 = vand.u32 %v1004, 4294901760
    %v1289 = vsub.f32 %v1004, %v1288
    %v1290 = vand.u32 %v1289, 4294901760
    %v1291 = vsub.f32 %v1289, %v1290
    %v1292 = vand.u32 %v1291, 4294901760
    %1293 = vmatpush1.msra.mxu0 %v1292
    %1294 = vmatprep.subr.mxu0 0.0
    %v1295 = vand.u32 %v1005, 4294901760
    %v1296 = vsub.f32 %v1005, %v1295
    %v1297 = vand.u32 %v1296, 4294901760
    %v1298 = vsub.f32 %v1296, %v1297
    %v1299 = vand.u32 %v1298, 4294901760
    %1300 = vmatpush1.msra.mxu0 %v1299
    %1301 = vmatprep.subr.mxu0 0.0
    %v1302 = vand.u32 %v1006, 4294901760
    %v1303 = vsub.f32 %v1006, %v1302
    %v1304 = vand.u32 %v1303, 4294901760
    %v1305 = vsub.f32 %v1303, %v1304
    %v1306 = vand.u32 %v1305, 4294901760
    %1307 = vmatpush1.msra.mxu0 %v1306
    %1308 = vmatprep.subr.mxu0 0.0
    %v1309 = vand.u32 %v1007, 4294901760
    %v1310 = vsub.f32 %v1007, %v1309
    %v1311 = vand.u32 %v1310, 4294901760
    %v1312 = vsub.f32 %v1310, %v1311
    %v1313 = vand.u32 %v1312, 4294901760
    %1314 = vmatpush1.msra.mxu0 %v1313
    %1315 = vmatprep.subr.mxu0 0.0
    %v1316 = vand.u32 %v1008, 4294901760
    %v1317 = vsub.f32 %v1008, %v1316
    %v1318 = vand.u32 %v1317, 4294901760
    %v1319 = vsub.f32 %v1317, %v1318
    %v1320 = vand.u32 %v1319, 4294901760
    %1321 = vmatpush1.msra.mxu0 %v1320
    %1322 = vmatprep.subr.mxu0 0.0
    %v1323 = vand.u32 %v1009, 4294901760
    %v1324 = vsub.f32 %v1009, %v1323
    %v1325 = vand.u32 %v1324, 4294901760
    %v1326 = vsub.f32 %v1324, %v1325
    %v1327 = vand.u32 %v1326, 4294901760
    %1328 = vmatpush1.msra.mxu0 %v1327
    %1329 = vmatprep.subr.mxu0 0.0
    %v1330 = vand.u32 %v1010, 4294901760
    %v1331 = vsub.f32 %v1010, %v1330
    %v1332 = vand.u32 %v1331, 4294901760
    %v1333 = vsub.f32 %v1331, %v1332
    %v1334 = vand.u32 %v1333, 4294901760
    %1335 = vmatpush1.msra.mxu0 %v1334
    %1336 = vmatprep.subr.mxu0 0.0
    %v1337 = vand.u32 %v1011, 4294901760
    %v1338 = vsub.f32 %v1011, %v1337
    %v1339 = vand.u32 %v1338, 4294901760
    %v1340 = vsub.f32 %v1338, %v1339
    %v1341 = vand.u32 %v1340, 4294901760
    %1342 = vmatpush1.msra.mxu0 %v1341
    %1343 = vmatprep.subr.mxu0 0.0
    %v1344 = vand.u32 %v1012, 4294901760
    %v1345 = vsub.f32 %v1012, %v1344
    %v1346 = vand.u32 %v1345, 4294901760
    %v1347 = vsub.f32 %v1345, %v1346
    %v1348 = vand.u32 %v1347, 4294901760
    %1349 = vmatpush1.msra.mxu0 %v1348
    %1350 = vmatprep.subr.mxu0 0.0
    %v1351 = vand.u32 %v1013, 4294901760
    %v1352 = vsub.f32 %v1013, %v1351
    %v1353 = vand.u32 %v1352, 4294901760
    %v1354 = vsub.f32 %v1352, %v1353
    %v1355 = vand.u32 %v1354, 4294901760
    %1356 = vmatpush1.msra.mxu0 %v1355
    %v1357 = vand.u32 %v981, 4294901760
    %1358 = vmatprep.mubr.f32.mxu0 %v1357
    %v1359 = vand.u32 %v980, 4294901760
    %1360 = vmatmul.mubr.f32.gmra.mrb[0].mxu0 %v1359
    %v1361 = vpop.f32.mrb[0].mxu0
    %v1362 = vadd.f32 %v1130, %v1361
    %v1363 = vpop.f32.mrb[0].mxu0
    %1364 = vdwg.mxu0
    %1365 = vmatprep.subr.mxu0 0.0
    %v1366 = vand.u32 %v982, 4294901760
    %v1367 = vsub.f32 %v982, %v1366
    %1368 = vmatpush1.msra.mxu0 %v1367
    %1369 = vmatprep.subr.mxu0 0.0
    %v1370 = vand.u32 %v983, 4294901760
    %v1371 = vsub.f32 %v983, %v1370
    %1372 = vmatpush1.msra.mxu0 %v1371
    %1373 = vmatprep.subr.mxu0 0.0
    %v1374 = vand.u32 %v984, 4294901760
    %v1375 = vsub.f32 %v984, %v1374
    %1376 = vmatpush1.msra.mxu0 %v1375
    %1377 = vmatprep.subr.mxu0 0.0
    %v1378 = vand.u32 %v985, 4294901760
    %v1379 = vsub.f32 %v985, %v1378
    %1380 = vmatpush1.msra.mxu0 %v1379
    %1381 = vmatprep.subr.mxu0 0.0
    %v1382 = vand.u32 %v986, 4294901760
    %v1383 = vsub.f32 %v986, %v1382
    %1384 = vmatpush1.msra.mxu0 %v1383
    %1385 = vmatprep.subr.mxu0 0.0
    %v1386 = vand.u32 %v987, 4294901760
    %v1387 = vsub.f32 %v987, %v1386
    %1388 = vmatpush1.msra.mxu0 %v1387
    %1389 = vmatprep.subr.mxu0 0.0
    %v1390 = vand.u32 %v988, 4294901760
    %v1391 = vsub.f32 %v988, %v1390
    %1392 = vmatpush1.msra.mxu0 %v1391
    %1393 = vmatprep.subr.mxu0 0.0
    %v1394 = vand.u32 %v989, 4294901760
    %v1395 = vsub.f32 %v989, %v1394
    %1396 = vmatpush1.msra.mxu0 %v1395
    %1397 = vmatprep.subr.mxu0 0.0
    %v1398 = vand.u32 %v990, 4294901760
    %v1399 = vsub.f32 %v990, %v1398
    %1400 = vmatpush1.msra.mxu0 %v1399
    %1401 = vmatprep.subr.mxu0 0.0
    %v1402 = vand.u32 %v991, 4294901760
    %v1403 = vsub.f32 %v991, %v1402
    %1404 = vmatpush1.msra.mxu0 %v1403
    %1405 = vmatprep.subr.mxu0 0.0
    %v1406 = vand.u32 %v992, 4294901760
    %v1407 = vsub.f32 %v992, %v1406
    %1408 = vmatpush1.msra.mxu0 %v1407
    %1409 = vmatprep.subr.mxu0 0.0
    %v1410 = vand.u32 %v993, 4294901760
    %v1411 = vsub.f32 %v993, %v1410
    %1412 = vmatpush1.msra.mxu0 %v1411
    %1413 = vmatprep.subr.mxu0 0.0
    %v1414 = vand.u32 %v994, 4294901760
    %v1415 = vsub.f32 %v994, %v1414
    %1416 = vmatpush1.msra.mxu0 %v1415
    %1417 = vmatprep.subr.mxu0 0.0
    %v1418 = vand.u32 %v995, 4294901760
    %v1419 = vsub.f32 %v995, %v1418
    %1420 = vmatpush1.msra.mxu0 %v1419
    %1421 = vmatprep.subr.mxu0 0.0
    %v1422 = vand.u32 %v996, 4294901760
    %v1423 = vsub.f32 %v996, %v1422
    %1424 = vmatpush1.msra.mxu0 %v1423
    %1425 = vmatprep.subr.mxu0 0.0
    %v1426 = vand.u32 %v997, 4294901760
    %v1427 = vsub.f32 %v997, %v1426
    %1428 = vmatpush1.msra.mxu0 %v1427
    %1429 = vmatprep.subr.mxu0 0.0
    %v1430 = vand.u32 %v998, 4294901760
    %v1431 = vsub.f32 %v998, %v1430
    %1432 = vmatpush1.msra.mxu0 %v1431
    %1433 = vmatprep.subr.mxu0 0.0
    %v1434 = vand.u32 %v999, 4294901760
    %v1435 = vsub.f32 %v999, %v1434
    %1436 = vmatpush1.msra.mxu0 %v1435
    %1437 = vmatprep.subr.mxu0 0.0
    %v1438 = vand.u32 %v1000, 4294901760
    %v1439 = vsub.f32 %v1000, %v1438
    %1440 = vmatpush1.msra.mxu0 %v1439
    %1441 = vmatprep.subr.mxu0 0.0
    %v1442 = vand.u32 %v1001, 4294901760
    %v1443 = vsub.f32 %v1001, %v1442
    %1444 = vmatpush1.msra.mxu0 %v1443
    %1445 = vmatprep.subr.mxu0 0.0
    %v1446 = vand.u32 %v1002, 4294901760
    %v1447 = vsub.f32 %v1002, %v1446
    %1448 = vmatpush1.msra.mxu0 %v1447
    %1449 = vmatprep.subr.mxu0 0.0
    %v1450 = vand.u32 %v1003, 4294901760
    %v1451 = vsub.f32 %v1003, %v1450
    %1452 = vmatpush1.msra.mxu0 %v1451
    %1453 = vmatprep.subr.mxu0 0.0
    %v1454 = vand.u32 %v1004, 4294901760
    %v1455 = vsub.f32 %v1004, %v1454
    %1456 = vmatpush1.msra.mxu0 %v1455
    %1457 = vmatprep.subr.mxu0 0.0
    %v1458 = vand.u32 %v1005, 4294901760
    %v1459 = vsub.f32 %v1005, %v1458
    %1460 = vmatpush1.msra.mxu0 %v1459
    %1461 = vmatprep.subr.mxu0 0.0
    %v1462 = vand.u32 %v1006, 4294901760
    %v1463 = vsub.f32 %v1006, %v1462
    %1464 = vmatpush1.msra.mxu0 %v1463
    %1465 = vmatprep.subr.mxu0 0.0
    %v1466 = vand.u32 %v1007, 4294901760
    %v1467 = vsub.f32 %v1007, %v1466
    %1468 = vmatpush1.msra.mxu0 %v1467
    %1469 = vmatprep.subr.mxu0 0.0
    %v1470 = vand.u32 %v1008, 4294901760
    %v1471 = vsub.f32 %v1008, %v1470
    %1472 = vmatpush1.msra.mxu0 %v1471
    %1473 = vmatprep.subr.mxu0 0.0
    %v1474 = vand.u32 %v1009, 4294901760
    %v1475 = vsub.f32 %v1009, %v1474
    %1476 = vmatpush1.msra.mxu0 %v1475
    %1477 = vmatprep.subr.mxu0 0.0
    %v1478 = vand.u32 %v1010, 4294901760
    %v1479 = vsub.f32 %v1010, %v1478
    %1480 = vmatpush1.msra.mxu0 %v1479
    %1481 = vmatprep.subr.mxu0 0.0
    %v1482 = vand.u32 %v1011, 4294901760
    %v1483 = vsub.f32 %v1011, %v1482
    %1484 = vmatpush1.msra.mxu0 %v1483
    %1485 = vmatprep.subr.mxu0 0.0
    %v1486 = vand.u32 %v1012, 4294901760
    %v1487 = vsub.f32 %v1012, %v1486
    %1488 = vmatpush1.msra.mxu0 %v1487
    %1489 = vmatprep.subr.mxu0 0.0
    %v1490 = vand.u32 %v1013, 4294901760
    %v1491 = vsub.f32 %v1013, %v1490
    %1492 = vmatpush1.msra.mxu0 %v1491
    %v1493 = vand.u32 %v981, 4294901760
    %v1494 = vsub.f32 %v981, %v1493
    %1495 = vmatprep.mubr.f32.mxu0 %v1494
    %v1496 = vand.u32 %v980, 4294901760
    %v1497 = vsub.f32 %v980, %v1496
    %1498 = vmatmul.mubr.f32.gmra.mrb[0].mxu0 %v1497
    %v1499 = vpop.f32.mrb[0].mxu0
    %v1500 = vadd.f32 %v1362, %v1499
    %v1501 = vpop.f32.mrb[0].mxu0
    %1502 = vdwg.mxu0
    %1503 = vmatprep.subr.mxu0 0.0
    %v1504 = vand.u32 %v982, 4294901760
    %1505 = vmatpush1.msra.mxu0 %v1504
    %1506 = vmatprep.subr.mxu0 0.0
    %v1507 = vand.u32 %v983, 4294901760
    %1508 = vmatpush1.msra.mxu0 %v1507
    %1509 = vmatprep.subr.mxu0 0.0
    %v1510 = vand.u32 %v984, 4294901760
    %1511 = vmatpush1.msra.mxu0 %v1510
    %1512 = vmatprep.subr.mxu0 0.0
    %v1513 = vand.u32 %v985, 4294901760
    %1514 = vmatpush1.msra.mxu0 %v1513
    %1515 = vmatprep.subr.mxu0 0.0
    %v1516 = vand.u32 %v986, 4294901760
    %1517 = vmatpush1.msra.mxu0 %v1516
    %1518 = vmatprep.subr.mxu0 0.0
    %v1519 = vand.u32 %v987, 4294901760
    %1520 = vmatpush1.msra.mxu0 %v1519
    %1521 = vmatprep.subr.mxu0 0.0
    %v1522 = vand.u32 %v988, 4294901760
    %1523 = vmatpush1.msra.mxu0 %v1522
    %1524 = vmatprep.subr.mxu0 0.0
    %v1525 = vand.u32 %v989, 4294901760
    %1526 = vmatpush1.msra.mxu0 %v1525
    %1527 = vmatprep.subr.mxu0 0.0
    %v1528 = vand.u32 %v990, 4294901760
    %1529 = vmatpush1.msra.mxu0 %v1528
    %1530 = vmatprep.subr.mxu0 0.0
    %v1531 = vand.u32 %v991, 4294901760
    %1532 = vmatpush1.msra.mxu0 %v1531
    %1533 = vmatprep.subr.mxu0 0.0
    %v1534 = vand.u32 %v992, 4294901760
    %1535 = vmatpush1.msra.mxu0 %v1534
    %1536 = vmatprep.subr.mxu0 0.0
    %v1537 = vand.u32 %v993, 4294901760
    %1538 = vmatpush1.msra.mxu0 %v1537
    %1539 = vmatprep.subr.mxu0 0.0
    %v1540 = vand.u32 %v994, 4294901760
    %1541 = vmatpush1.msra.mxu0 %v1540
    %1542 = vmatprep.subr.mxu0 0.0
    %v1543 = vand.u32 %v995, 4294901760
    %1544 = vmatpush1.msra.mxu0 %v1543
    %1545 = vmatprep.subr.mxu0 0.0
    %v1546 = vand.u32 %v996, 4294901760
    %1547 = vmatpush1.msra.mxu0 %v1546
    %1548 = vmatprep.subr.mxu0 0.0
    %v1549 = vand.u32 %v997, 4294901760
    %1550 = vmatpush1.msra.mxu0 %v1549
    %1551 = vmatprep.subr.mxu0 0.0
    %v1552 = vand.u32 %v998, 4294901760
    %1553 = vmatpush1.msra.mxu0 %v1552
    %1554 = vmatprep.subr.mxu0 0.0
    %v1555 = vand.u32 %v999, 4294901760
    %1556 = vmatpush1.msra.mxu0 %v1555
    %1557 = vmatprep.subr.mxu0 0.0
    %v1558 = vand.u32 %v1000, 4294901760
    %1559 = vmatpush1.msra.mxu0 %v1558
    %1560 = vmatprep.subr.mxu0 0.0
    %v1561 = vand.u32 %v1001, 4294901760
    %1562 = vmatpush1.msra.mxu0 %v1561
    %1563 = vmatprep.subr.mxu0 0.0
    %v1564 = vand.u32 %v1002, 4294901760
    %1565 = vmatpush1.msra.mxu0 %v1564
    %1566 = vmatprep.subr.mxu0 0.0
    %v1567 = vand.u32 %v1003, 4294901760
    %1568 = vmatpush1.msra.mxu0 %v1567
    %1569 = vmatprep.subr.mxu0 0.0
    %v1570 = vand.u32 %v1004, 4294901760
    %1571 = vmatpush1.msra.mxu0 %v1570
    %1572 = vmatprep.subr.mxu0 0.0
    %v1573 = vand.u32 %v1005, 4294901760
    %1574 = vmatpush1.msra.mxu0 %v1573
    %1575 = vmatprep.subr.mxu0 0.0
    %v1576 = vand.u32 %v1006, 4294901760
    %1577 = vmatpush1.msra.mxu0 %v1576
    %1578 = vmatprep.subr.mxu0 0.0
    %v1579 = vand.u32 %v1007, 4294901760
    %1580 = vmatpush1.msra.mxu0 %v1579
    %1581 = vmatprep.subr.mxu0 0.0
    %v1582 = vand.u32 %v1008, 4294901760
    %1583 = vmatpush1.msra.mxu0 %v1582
    %1584 = vmatprep.subr.mxu0 0.0
    %v1585 = vand.u32 %v1009, 4294901760
    %1586 = vmatpush1.msra.mxu0 %v1585
    %1587 = vmatprep.subr.mxu0 0.0
    %v1588 = vand.u32 %v1010, 4294901760
    %1589 = vmatpush1.msra.mxu0 %v1588
    %1590 = vmatprep.subr.mxu0 0.0
    %v1591 = vand.u32 %v1011, 4294901760
    %1592 = vmatpush1.msra.mxu0 %v1591
    %1593 = vmatprep.subr.mxu0 0.0
    %v1594 = vand.u32 %v1012, 4294901760
    %1595 = vmatpush1.msra.mxu0 %v1594
    %1596 = vmatprep.subr.mxu0 0.0
    %v1597 = vand.u32 %v1013, 4294901760
    %1598 = vmatpush1.msra.mxu0 %v1597
    %v1599 = vand.u32 %v981, 4294901760
    %v1600 = vsub.f32 %v981, %v1599
    %v1601 = vand.u32 %v1600, 4294901760
    %1602 = vmatprep.mubr.f32.mxu0 %v1601
    %v1603 = vand.u32 %v980, 4294901760
    %v1604 = vsub.f32 %v980, %v1603
    %v1605 = vand.u32 %v1604, 4294901760
    %1606 = vmatmul.mubr.f32.gmra.mrb[0].mxu0 %v1605
    %v1607 = vpop.f32.mrb[0].mxu0
    %v1608 = vadd.f32 %v1500, %v1607
    %v1609 = vpop.f32.mrb[0].mxu0
    %1610 = vdwg.mxu0
    %1611 = vmatprep.subr.mxu0 0.0
    %v1612 = vand.u32 %v982, 4294901760
    %v1613 = vsub.f32 %v982, %v1612
    %v1614 = vand.u32 %v1613, 4294901760
    %1615 = vmatpush1.msra.mxu0 %v1614
    %1616 = vmatprep.subr.mxu0 0.0
    %v1617 = vand.u32 %v983, 4294901760
    %v1618 = vsub.f32 %v983, %v1617
    %v1619 = vand.u32 %v1618, 4294901760
    %1620 = vmatpush1.msra.mxu0 %v1619
    %1621 = vmatprep.subr.mxu0 0.0
    %v1622 = vand.u32 %v984, 4294901760
    %v1623 = vsub.f32 %v984, %v1622
    %v1624 = vand.u32 %v1623, 4294901760
    %1625 = vmatpush1.msra.mxu0 %v1624
    %1626 = vmatprep.subr.mxu0 0.0
    %v1627 = vand.u32 %v985, 4294901760
    %v1628 = vsub.f32 %v985, %v1627
    %v1629 = vand.u32 %v1628, 4294901760
    %1630 = vmatpush1.msra.mxu0 %v1629
    %1631 = vmatprep.subr.mxu0 0.0
    %v1632 = vand.u32 %v986, 4294901760
    %v1633 = vsub.f32 %v986, %v1632
    %v1634 = vand.u32 %v1633, 4294901760
    %1635 = vmatpush1.msra.mxu0 %v1634
    %1636 = vmatprep.subr.mxu0 0.0
    %v1637 = vand.u32 %v987, 4294901760
    %v1638 = vsub.f32 %v987, %v1637
    %v1639 = vand.u32 %v1638, 4294901760
    %1640 = vmatpush1.msra.mxu0 %v1639
    %1641 = vmatprep.subr.mxu0 0.0
    %v1642 = vand.u32 %v988, 4294901760
    %v1643 = vsub.f32 %v988, %v1642
    %v1644 = vand.u32 %v1643, 4294901760
    %1645 = vmatpush1.msra.mxu0 %v1644
    %1646 = vmatprep.subr.mxu0 0.0
    %v1647 = vand.u32 %v989, 4294901760
    %v1648 = vsub.f32 %v989, %v1647
    %v1649 = vand.u32 %v1648, 4294901760
    %1650 = vmatpush1.msra.mxu0 %v1649
    %1651 = vmatprep.subr.mxu0 0.0
    %v1652 = vand.u32 %v990, 4294901760
    %v1653 = vsub.f32 %v990, %v1652
    %v1654 = vand.u32 %v1653, 4294901760
    %1655 = vmatpush1.msra.mxu0 %v1654
    %1656 = vmatprep.subr.mxu0 0.0
    %v1657 = vand.u32 %v991, 4294901760
    %v1658 = vsub.f32 %v991, %v1657
    %v1659 = vand.u32 %v1658, 4294901760
    %1660 = vmatpush1.msra.mxu0 %v1659
    %1661 = vmatprep.subr.mxu0 0.0
    %v1662 = vand.u32 %v992, 4294901760
    %v1663 = vsub.f32 %v992, %v1662
    %v1664 = vand.u32 %v1663, 4294901760
    %1665 = vmatpush1.msra.mxu0 %v1664
    %1666 = vmatprep.subr.mxu0 0.0
    %v1667 = vand.u32 %v993, 4294901760
    %v1668 = vsub.f32 %v993, %v1667
    %v1669 = vand.u32 %v1668, 4294901760
    %1670 = vmatpush1.msra.mxu0 %v1669
    %1671 = vmatprep.subr.mxu0 0.0
    %v1672 = vand.u32 %v994, 4294901760
    %v1673 = vsub.f32 %v994, %v1672
    %v1674 = vand.u32 %v1673, 4294901760
    %1675 = vmatpush1.msra.mxu0 %v1674
    %1676 = vmatprep.subr.mxu0 0.0
    %v1677 = vand.u32 %v995, 4294901760
    %v1678 = vsub.f32 %v995, %v1677
    %v1679 = vand.u32 %v1678, 4294901760
    %1680 = vmatpush1.msra.mxu0 %v1679
    %1681 = vmatprep.subr.mxu0 0.0
    %v1682 = vand.u32 %v996, 4294901760
    %v1683 = vsub.f32 %v996, %v1682
    %v1684 = vand.u32 %v1683, 4294901760
    %1685 = vmatpush1.msra.mxu0 %v1684
    %1686 = vmatprep.subr.mxu0 0.0
    %v1687 = vand.u32 %v997, 4294901760
    %v1688 = vsub.f32 %v997, %v1687
    %v1689 = vand.u32 %v1688, 4294901760
    %1690 = vmatpush1.msra.mxu0 %v1689
    %1691 = vmatprep.subr.mxu0 0.0
    %v1692 = vand.u32 %v998, 4294901760
    %v1693 = vsub.f32 %v998, %v1692
    %v1694 = vand.u32 %v1693, 4294901760
    %1695 = vmatpush1.msra.mxu0 %v1694
    %1696 = vmatprep.subr.mxu0 0.0
    %v1697 = vand.u32 %v999, 4294901760
    %v1698 = vsub.f32 %v999, %v1697
    %v1699 = vand.u32 %v1698, 4294901760
    %1700 = vmatpush1.msra.mxu0 %v1699
    %1701 = vmatprep.subr.mxu0 0.0
    %v1702 = vand.u32 %v1000, 4294901760
    %v1703 = vsub.f32 %v1000, %v1702
    %v1704 = vand.u32 %v1703, 4294901760
    %1705 = vmatpush1.msra.mxu0 %v1704
    %1706 = vmatprep.subr.mxu0 0.0
    %v1707 = vand.u32 %v1001, 4294901760
    %v1708 = vsub.f32 %v1001, %v1707
    %v1709 = vand.u32 %v1708, 4294901760
    %1710 = vmatpush1.msra.mxu0 %v1709
    %1711 = vmatprep.subr.mxu0 0.0
    %v1712 = vand.u32 %v1002, 4294901760
    %v1713 = vsub.f32 %v1002, %v1712
    %v1714 = vand.u32 %v1713, 4294901760
    %1715 = vmatpush1.msra.mxu0 %v1714
    %1716 = vmatprep.subr.mxu0 0.0
    %v1717 = vand.u32 %v1003, 4294901760
    %v1718 = vsub.f32 %v1003, %v1717
    %v1719 = vand.u32 %v1718, 4294901760
    %1720 = vmatpush1.msra.mxu0 %v1719
    %1721 = vmatprep.subr.mxu0 0.0
    %v1722 = vand.u32 %v1004, 4294901760
    %v1723 = vsub.f32 %v1004, %v1722
    %v1724 = vand.u32 %v1723, 4294901760
    %1725 = vmatpush1.msra.mxu0 %v1724
    %1726 = vmatprep.subr.mxu0 0.0
    %v1727 = vand.u32 %v1005, 4294901760
    %v1728 = vsub.f32 %v1005, %v1727
    %v1729 = vand.u32 %v1728, 4294901760
    %1730 = vmatpush1.msra.mxu0 %v1729
    %1731 = vmatprep.subr.mxu0 0.0
    %v1732 = vand.u32 %v1006, 4294901760
    %v1733 = vsub.f32 %v1006, %v1732
    %v1734 = vand.u32 %v1733, 4294901760
    %1735 = vmatpush1.msra.mxu0 %v1734
    %1736 = vmatprep.subr.mxu0 0.0
    %v1737 = vand.u32 %v1007, 4294901760
    %v1738 = vsub.f32 %v1007, %v1737
    %v1739 = vand.u32 %v1738, 4294901760
    %1740 = vmatpush1.msra.mxu0 %v1739
    %1741 = vmatprep.subr.mxu0 0.0
    %v1742 = vand.u32 %v1008, 4294901760
    %v1743 = vsub.f32 %v1008, %v1742
    %v1744 = vand.u32 %v1743, 4294901760
    %1745 = vmatpush1.msra.mxu0 %v1744
    %1746 = vmatprep.subr.mxu0 0.0
    %v1747 = vand.u32 %v1009, 4294901760
    %v1748 = vsub.f32 %v1009, %v1747
    %v1749 = vand.u32 %v1748, 4294901760
    %1750 = vmatpush1.msra.mxu0 %v1749
    %1751 = vmatprep.subr.mxu0 0.0
    %v1752 = vand.u32 %v1010, 4294901760
    %v1753 = vsub.f32 %v1010, %v1752
    %v1754 = vand.u32 %v1753, 4294901760
    %1755 = vmatpush1.msra.mxu0 %v1754
    %1756 = vmatprep.subr.mxu0 0.0
    %v1757 = vand.u32 %v1011, 4294901760
    %v1758 = vsub.f32 %v1011, %v1757
    %v1759 = vand.u32 %v1758, 4294901760
    %1760 = vmatpush1.msra.mxu0 %v1759
    %1761 = vmatprep.subr.mxu0 0.0
    %v1762 = vand.u32 %v1012, 4294901760
    %v1763 = vsub.f32 %v1012, %v1762
    %v1764 = vand.u32 %v1763, 4294901760
    %1765 = vmatpush1.msra.mxu0 %v1764
    %1766 = vmatprep.subr.mxu0 0.0
    %v1767 = vand.u32 %v1013, 4294901760
    %v1768 = vsub.f32 %v1013, %v1767
    %v1769 = vand.u32 %v1768, 4294901760
    %1770 = vmatpush1.msra.mxu0 %v1769
    %v1771 = vand.u32 %v981, 4294901760
    %1772 = vmatprep.mubr.f32.mxu0 %v1771
    %v1773 = vand.u32 %v980, 4294901760
    %1774 = vmatmul.mubr.f32.gmra.mrb[0].mxu0 %v1773
    %v1775 = vpop.f32.mrb[0].mxu0
    %v1776 = vadd.f32 %v1608, %v1775
    %v1777 = vpop.f32.mrb[0].mxu0
    %1778 = vdwg.mxu0
    %1779 = vmatprep.subr.mxu0 0.0
    %v1780 = vand.u32 %v982, 4294901760
    %1781 = vmatpush1.msra.mxu0 %v1780
    %1782 = vmatprep.subr.mxu0 0.0
    %v1783 = vand.u32 %v983, 4294901760
    %1784 = vmatpush1.msra.mxu0 %v1783
    %1785 = vmatprep.subr.mxu0 0.0
    %v1786 = vand.u32 %v984, 4294901760
    %1787 = vmatpush1.msra.mxu0 %v1786
    %1788 = vmatprep.subr.mxu0 0.0
    %v1789 = vand.u32 %v985, 4294901760
    %1790 = vmatpush1.msra.mxu0 %v1789
    %1791 = vmatprep.subr.mxu0 0.0
    %v1792 = vand.u32 %v986, 4294901760
    %1793 = vmatpush1.msra.mxu0 %v1792
    %1794 = vmatprep.subr.mxu0 0.0
    %v1795 = vand.u32 %v987, 4294901760
    %1796 = vmatpush1.msra.mxu0 %v1795
    %1797 = vmatprep.subr.mxu0 0.0
    %v1798 = vand.u32 %v988, 4294901760
    %1799 = vmatpush1.msra.mxu0 %v1798
    %1800 = vmatprep.subr.mxu0 0.0
    %v1801 = vand.u32 %v989, 4294901760
    %1802 = vmatpush1.msra.mxu0 %v1801
    %1803 = vmatprep.subr.mxu0 0.0
    %v1804 = vand.u32 %v990, 4294901760
    %1805 = vmatpush1.msra.mxu0 %v1804
    %1806 = vmatprep.subr.mxu0 0.0
    %v1807 = vand.u32 %v991, 4294901760
    %1808 = vmatpush1.msra.mxu0 %v1807
    %1809 = vmatprep.subr.mxu0 0.0
    %v1810 = vand.u32 %v992, 4294901760
    %1811 = vmatpush1.msra.mxu0 %v1810
    %1812 = vmatprep.subr.mxu0 0.0
    %v1813 = vand.u32 %v993, 4294901760
    %1814 = vmatpush1.msra.mxu0 %v1813
    %1815 = vmatprep.subr.mxu0 0.0
    %v1816 = vand.u32 %v994, 4294901760
    %1817 = vmatpush1.msra.mxu0 %v1816
    %1818 = vmatprep.subr.mxu0 0.0
    %v1819 = vand.u32 %v995, 4294901760
    %1820 = vmatpush1.msra.mxu0 %v1819
    %1821 = vmatprep.subr.mxu0 0.0
    %v1822 = vand.u32 %v996, 4294901760
    %1823 = vmatpush1.msra.mxu0 %v1822
    %1824 = vmatprep.subr.mxu0 0.0
    %v1825 = vand.u32 %v997, 4294901760
    %1826 = vmatpush1.msra.mxu0 %v1825
    %1827 = vmatprep.subr.mxu0 0.0
    %v1828 = vand.u32 %v998, 4294901760
    %1829 = vmatpush1.msra.mxu0 %v1828
    %1830 = vmatprep.subr.mxu0 0.0
    %v1831 = vand.u32 %v999, 4294901760
    %1832 = vmatpush1.msra.mxu0 %v1831
    %1833 = vmatprep.subr.mxu0 0.0
    %v1834 = vand.u32 %v1000, 4294901760
    %1835 = vmatpush1.msra.mxu0 %v1834
    %1836 = vmatprep.subr.mxu0 0.0
    %v1837 = vand.u32 %v1001, 4294901760
    %1838 = vmatpush1.msra.mxu0 %v1837
    %1839 = vmatprep.subr.mxu0 0.0
    %v1840 = vand.u32 %v1002, 4294901760
    %1841 = vmatpush1.msra.mxu0 %v1840
    %1842 = vmatprep.subr.mxu0 0.0
    %v1843 = vand.u32 %v1003, 4294901760
    %1844 = vmatpush1.msra.mxu0 %v1843
    %1845 = vmatprep.subr.mxu0 0.0
    %v1846 = vand.u32 %v1004, 4294901760
    %1847 = vmatpush1.msra.mxu0 %v1846
    %1848 = vmatprep.subr.mxu0 0.0
    %v1849 = vand.u32 %v1005, 4294901760
    %1850 = vmatpush1.msra.mxu0 %v1849
    %1851 = vmatprep.subr.mxu0 0.0
    %v1852 = vand.u32 %v1006, 4294901760
    %1853 = vmatpush1.msra.mxu0 %v1852
    %1854 = vmatprep.subr.mxu0 0.0
    %v1855 = vand.u32 %v1007, 4294901760
    %1856 = vmatpush1.msra.mxu0 %v1855
    %1857 = vmatprep.subr.mxu0 0.0
    %v1858 = vand.u32 %v1008, 4294901760
    %1859 = vmatpush1.msra.mxu0 %v1858
    %1860 = vmatprep.subr.mxu0 0.0
    %v1861 = vand.u32 %v1009, 4294901760
    %1862 = vmatpush1.msra.mxu0 %v1861
    %1863 = vmatprep.subr.mxu0 0.0
    %v1864 = vand.u32 %v1010, 4294901760
    %1865 = vmatpush1.msra.mxu0 %v1864
    %1866 = vmatprep.subr.mxu0 0.0
    %v1867 = vand.u32 %v1011, 4294901760
    %1868 = vmatpush1.msra.mxu0 %v1867
    %1869 = vmatprep.subr.mxu0 0.0
    %v1870 = vand.u32 %v1012, 4294901760
    %1871 = vmatpush1.msra.mxu0 %v1870
    %1872 = vmatprep.subr.mxu0 0.0
    %v1873 = vand.u32 %v1013, 4294901760
    %1874 = vmatpush1.msra.mxu0 %v1873
    %v1875 = vand.u32 %v981, 4294901760
    %1876 = vmatprep.mubr.f32.mxu0 %v1875
    %v1877 = vand.u32 %v980, 4294901760
    %1878 = vmatmul.mubr.f32.gmra.mrb[0].mxu0 %v1877
    %v1879 = vpop.f32.mrb[0].mxu0
    %v1880 = vadd.f32 %v1776, %v1879
    %v1881 = vpop.f32.mrb[0].mxu0
    %1882 = vdwg.mxu0
    %v1883 = vmax.f32 %v1880, 0.0
    %v1884 = vld [vmem:[#allocation8] sm:$0xff]
    %v1885 = vld [vmem:[#allocation8 + $0x8] sm:$0xff]
    %v1886 = vld [vmem:[#allocation8 + $0x10] sm:$0xff]
    %v1887 = vld [vmem:[#allocation8 + $0x18] sm:$0xff]
    %v1888 = vld [vmem:[#allocation8 + $0x20] sm:$0xff]
    %v1889 = vld [vmem:[#allocation8 + $0x28] sm:$0xff]
    %v1890 = vld [vmem:[#allocation8 + $0x30] sm:$0xff]
    %v1891 = vld [vmem:[#allocation8 + $0x38] sm:$0xff]
    %v1892 = vld [vmem:[#allocation8 + $0x40] sm:$0xff]
    %v1893 = vld [vmem:[#allocation8 + $0x48] sm:$0xff]
    %v1894 = vld [vmem:[#allocation8 + $0x50] sm:$0xff]
    %v1895 = vld [vmem:[#allocation8 + $0x58] sm:$0xff]
    %v1896 = vld [vmem:[#allocation8 + $0x60] sm:$0xff]
    %v1897 = vld [vmem:[#allocation8 + $0x68] sm:$0xff]
    %v1898 = vld [vmem:[#allocation8 + $0x70] sm:$0xff]
    %v1899 = vld [vmem:[#allocation8 + $0x78] sm:$0xff]
    %v1900 = vld [vmem:[%s6] sm:$0x1]
    %v1902 = vlaneseq
    %v1903 = vshrl.u32 %v1902, 7
    %v1904 = vsub.s32 0, %v1903
    %v1905 = vrot.slane %v1900, %v1904
    %1907 = vmatprep.subr.mxu0 0.0
    %v1908 = vand.u32 %v1884, 4294901760
    %1909 = vmatpush1.msra.mxu0 %v1908
    %1910 = vmatprep.subr.mxu0 0.0
    %v1911 = vand.u32 %v1885, 4294901760
    %1912 = vmatpush1.msra.mxu0 %v1911
    %1913 = vmatprep.subr.mxu0 0.0
    %v1914 = vand.u32 %v1886, 4294901760
    %1915 = vmatpush1.msra.mxu0 %v1914
    %1916 = vmatprep.subr.mxu0 0.0
    %v1917 = vand.u32 %v1887, 4294901760
    %1918 = vmatpush1.msra.mxu0 %v1917
    %1919 = vmatprep.subr.mxu0 0.0
    %v1920 = vand.u32 %v1888, 4294901760
    %1921 = vmatpush1.msra.mxu0 %v1920
    %1922 = vmatprep.subr.mxu0 0.0
    %v1923 = vand.u32 %v1889, 4294901760
    %1924 = vmatpush1.msra.mxu0 %v1923
    %1925 = vmatprep.subr.mxu0 0.0
    %v1926 = vand.u32 %v1890, 4294901760
    %1927 = vmatpush1.msra.mxu0 %v1926
    %1928 = vmatprep.subr.mxu0 0.0
    %v1929 = vand.u32 %v1891, 4294901760
    %1930 = vmatpush1.msra.mxu0 %v1929
    %1931 = vmatprep.subr.mxu0 0.0
    %v1932 = vand.u32 %v1892, 4294901760
    %1933 = vmatpush1.msra.mxu0 %v1932
    %1934 = vmatprep.subr.mxu0 0.0
    %v1935 = vand.u32 %v1893, 4294901760
    %1936 = vmatpush1.msra.mxu0 %v1935
    %1937 = vmatprep.subr.mxu0 0.0
    %v1938 = vand.u32 %v1894, 4294901760
    %1939 = vmatpush1.msra.mxu0 %v1938
    %1940 = vmatprep.subr.mxu0 0.0
    %v1941 = vand.u32 %v1895, 4294901760
    %1942 = vmatpush1.msra.mxu0 %v1941
    %1943 = vmatprep.subr.mxu0 0.0
    %v1944 = vand.u32 %v1896, 4294901760
    %1945 = vmatpush1.msra.mxu0 %v1944
    %1946 = vmatprep.subr.mxu0 0.0
    %v1947 = vand.u32 %v1897, 4294901760
    %1948 = vmatpush1.msra.mxu0 %v1947
    %1949 = vmatprep.subr.mxu0 0.0
    %v1950 = vand.u32 %v1898, 4294901760
    %1951 = vmatpush1.msra.mxu0 %v1950
    %1952 = vmatprep.subr.mxu0 0.0
    %v1953 = vand.u32 %v1899, 4294901760
    %1954 = vmatpush1.msra.mxu0 %v1953
    %1955 = vmatprep.subr.mxu0 0.0
    %1956 = vmatpush1.msra.mxu0 0.0
    %1957 = vmatprep.subr.mxu0 0.0
    %1958 = vmatpush1.msra.mxu0 0.0
    %1959 = vmatprep.subr.mxu0 0.0
    %1960 = vmatpush1.msra.mxu0 0.0
    %1961 = vmatprep.subr.mxu0 0.0
    %1962 = vmatpush1.msra.mxu0 0.0
    %1963 = vmatprep.subr.mxu0 0.0
    %1964 = vmatpush1.msra.mxu0 0.0
    %1965 = vmatprep.subr.mxu0 0.0
    %1966 = vmatpush1.msra.mxu0 0.0
    %1967 = vmatprep.subr.mxu0 0.0
    %1968 = vmatpush1.msra.mxu0 0.0
    %1969 = vmatprep.subr.mxu0 0.0
    %1970 = vmatpush1.msra.mxu0 0.0
    %1971 = vmatprep.subr.mxu0 0.0
    %1972 = vmatpush1.msra.mxu0 0.0
    %1973 = vmatprep.subr.mxu0 0.0
    %1974 = vmatpush1.msra.mxu0 0.0
    %1975 = vmatprep.subr.mxu0 0.0
    %1976 = vmatpush1.msra.mxu0 0.0
    %1977 = vmatprep.subr.mxu0 0.0
    %1978 = vmatpush1.msra.mxu0 0.0
    %1979 = vmatprep.subr.mxu0 0.0
    %1980 = vmatpush1.msra.mxu0 0.0
    %1981 = vmatprep.subr.mxu0 0.0
    %1982 = vmatpush1.msra.mxu0 0.0
    %1983 = vmatprep.subr.mxu0 0.0
    %1984 = vmatpush1.msra.mxu0 0.0
    %1985 = vmatprep.subr.mxu0 0.0
    %1986 = vmatpush1.msra.mxu0 0.0
    %1987 = vmatprep.mubr.f32.mxu0 0.0
    %v1988 = vand.u32 %v1883, 4294901760
    %v1989 = vsub.f32 %v1883, %v1988
    %v1990 = vand.u32 %v1989, 4294901760
    %v1991 = vsub.f32 %v1989, %v1990
    %v1992 = vand.u32 %v1991, 4294901760
    %1993 = vmatmul.mubr.f32.gmra.mrb[0].mxu0 %v1992
    %v1994 = vpop.f32.mrb[0].mxu0
    %v1995 = vadd.f32 %v1905, %v1994
    %v1996 = vpop.f32.mrb[0].mxu0
    %1997 = vdwg.mxu0
    %1998 = vmatprep.subr.mxu0 0.0
    %v1999 = vand.u32 %v1884, 4294901760
    %v2000 = vsub.f32 %v1884, %v1999
    %v2001 = vand.u32 %v2000, 4294901760
    %v2002 = vsub.f32 %v2000, %v2001
    %v2003 = vand.u32 %v2002, 4294901760
    %2004 = vmatpush1.msra.mxu0 %v2003
    %2005 = vmatprep.subr.mxu0 0.0
    %v2006 = vand.u32 %v1885, 4294901760
    %v2007 = vsub.f32 %v1885, %v2006
    %v2008 = vand.u32 %v2007, 4294901760
    %v2009 = vsub.f32 %v2007, %v2008
    %v2010 = vand.u32 %v2009, 4294901760
    %2011 = vmatpush1.msra.mxu0 %v2010
    %2012 = vmatprep.subr.mxu0 0.0
    %v2013 = vand.u32 %v1886, 4294901760
    %v2014 = vsub.f32 %v1886, %v2013
    %v2015 = vand.u32 %v2014, 4294901760
    %v2016 = vsub.f32 %v2014, %v2015
    %v2017 = vand.u32 %v2016, 4294901760
    %2018 = vmatpush1.msra.mxu0 %v2017
    %2019 = vmatprep.subr.mxu0 0.0
    %v2020 = vand.u32 %v1887, 4294901760
    %v2021 = vsub.f32 %v1887, %v2020
    %v2022 = vand.u32 %v2021, 4294901760
    %v2023 = vsub.f32 %v2021, %v2022
    %v2024 = vand.u32 %v2023, 4294901760
    %2025 = vmatpush1.msra.mxu0 %v2024
    %2026 = vmatprep.subr.mxu0 0.0
    %v2027 = vand.u32 %v1888, 4294901760
    %v2028 = vsub.f32 %v1888, %v2027
    %v2029 = vand.u32 %v2028, 4294901760
    %v2030 = vsub.f32 %v2028, %v2029
    %v2031 = vand.u32 %v2030, 4294901760
    %2032 = vmatpush1.msra.mxu0 %v2031
    %2033 = vmatprep.subr.mxu0 0.0
    %v2034 = vand.u32 %v1889, 4294901760
    %v2035 = vsub.f32 %v1889, %v2034
    %v2036 = vand.u32 %v2035, 4294901760
    %v2037 = vsub.f32 %v2035, %v2036
    %v2038 = vand.u32 %v2037, 4294901760
    %2039 = vmatpush1.msra.mxu0 %v2038
    %2040 = vmatprep.subr.mxu0 0.0
    %v2041 = vand.u32 %v1890, 4294901760
    %v2042 = vsub.f32 %v1890, %v2041
    %v2043 = vand.u32 %v2042, 4294901760
    %v2044 = vsub.f32 %v2042, %v2043
    %v2045 = vand.u32 %v2044, 4294901760
    %2046 = vmatpush1.msra.mxu0 %v2045
    %2047 = vmatprep.subr.mxu0 0.0
    %v2048 = vand.u32 %v1891, 4294901760
    %v2049 = vsub.f32 %v1891, %v2048
    %v2050 = vand.u32 %v2049, 4294901760
    %v2051 = vsub.f32 %v2049, %v2050
    %v2052 = vand.u32 %v2051, 4294901760
    %2053 = vmatpush1.msra.mxu0 %v2052
    %2054 = vmatprep.subr.mxu0 0.0
    %v2055 = vand.u32 %v1892, 4294901760
    %v2056 = vsub.f32 %v1892, %v2055
    %v2057 = vand.u32 %v2056, 4294901760
    %v2058 = vsub.f32 %v2056, %v2057
    %v2059 = vand.u32 %v2058, 4294901760
    %2060 = vmatpush1.msra.mxu0 %v2059
    %2061 = vmatprep.subr.mxu0 0.0
    %v2062 = vand.u32 %v1893, 4294901760
    %v2063 = vsub.f32 %v1893, %v2062
    %v2064 = vand.u32 %v2063, 4294901760
    %v2065 = vsub.f32 %v2063, %v2064
    %v2066 = vand.u32 %v2065, 4294901760
    %2067 = vmatpush1.msra.mxu0 %v2066
    %2068 = vmatprep.subr.mxu0 0.0
    %v2069 = vand.u32 %v1894, 4294901760
    %v2070 = vsub.f32 %v1894, %v2069
    %v2071 = vand.u32 %v2070, 4294901760
    %v2072 = vsub.f32 %v2070, %v2071
    %v2073 = vand.u32 %v2072, 4294901760
    %2074 = vmatpush1.msra.mxu0 %v2073
    %2075 = vmatprep.subr.mxu0 0.0
    %v2076 = vand.u32 %v1895, 4294901760
    %v2077 = vsub.f32 %v1895, %v2076
    %v2078 = vand.u32 %v2077, 4294901760
    %v2079 = vsub.f32 %v2077, %v2078
    %v2080 = vand.u32 %v2079, 4294901760
    %2081 = vmatpush1.msra.mxu0 %v2080
    %2082 = vmatprep.subr.mxu0 0.0
    %v2083 = vand.u32 %v1896, 4294901760
    %v2084 = vsub.f32 %v1896, %v2083
    %v2085 = vand.u32 %v2084, 4294901760
    %v2086 = vsub.f32 %v2084, %v2085
    %v2087 = vand.u32 %v2086, 4294901760
    %2088 = vmatpush1.msra.mxu0 %v2087
    %2089 = vmatprep.subr.mxu0 0.0
    %v2090 = vand.u32 %v1897, 4294901760
    %v2091 = vsub.f32 %v1897, %v2090
    %v2092 = vand.u32 %v2091, 4294901760
    %v2093 = vsub.f32 %v2091, %v2092
    %v2094 = vand.u32 %v2093, 4294901760
    %2095 = vmatpush1.msra.mxu0 %v2094
    %2096 = vmatprep.subr.mxu0 0.0
    %v2097 = vand.u32 %v1898, 4294901760
    %v2098 = vsub.f32 %v1898, %v2097
    %v2099 = vand.u32 %v2098, 4294901760
    %v2100 = vsub.f32 %v2098, %v2099
    %v2101 = vand.u32 %v2100, 4294901760
    %2102 = vmatpush1.msra.mxu0 %v2101
    %2103 = vmatprep.subr.mxu0 0.0
    %v2104 = vand.u32 %v1899, 4294901760
    %v2105 = vsub.f32 %v1899, %v2104
    %v2106 = vand.u32 %v2105, 4294901760
    %v2107 = vsub.f32 %v2105, %v2106
    %v2108 = vand.u32 %v2107, 4294901760
    %2109 = vmatpush1.msra.mxu0 %v2108
    %2110 = vmatprep.subr.mxu0 0.0
    %2111 = vmatpush1.msra.mxu0 0.0
    %2112 = vmatprep.subr.mxu0 0.0
    %2113 = vmatpush1.msra.mxu0 0.0
    %2114 = vmatprep.subr.mxu0 0.0
    %2115 = vmatpush1.msra.mxu0 0.0
    %2116 = vmatprep.subr.mxu0 0.0
    %2117 = vmatpush1.msra.mxu0 0.0
    %2118 = vmatprep.subr.mxu0 0.0
    %2119 = vmatpush1.msra.mxu0 0.0
    %2120 = vmatprep.subr.mxu0 0.0
    %2121 = vmatpush1.msra.mxu0 0.0
    %2122 = vmatprep.subr.mxu0 0.0
    %2123 = vmatpush1.msra.mxu0 0.0
    %2124 = vmatprep.subr.mxu0 0.0
    %2125 = vmatpush1.msra.mxu0 0.0
    %2126 = vmatprep.subr.mxu0 0.0
    %2127 = vmatpush1.msra.mxu0 0.0
    %2128 = vmatprep.subr.mxu0 0.0
    %2129 = vmatpush1.msra.mxu0 0.0
    %2130 = vmatprep.subr.mxu0 0.0
    %2131 = vmatpush1.msra.mxu0 0.0
    %2132 = vmatprep.subr.mxu0 0.0
    %2133 = vmatpush1.msra.mxu0 0.0
    %2134 = vmatprep.subr.mxu0 0.0
    %2135 = vmatpush1.msra.mxu0 0.0
    %2136 = vmatprep.subr.mxu0 0.0
    %2137 = vmatpush1.msra.mxu0 0.0
    %2138 = vmatprep.subr.mxu0 0.0
    %2139 = vmatpush1.msra.mxu0 0.0
    %2140 = vmatprep.subr.mxu0 0.0
    %2141 = vmatpush1.msra.mxu0 0.0
    %2142 = vmatprep.mubr.f32.mxu0 0.0
    %v2143 = vand.u32 %v1883, 4294901760
    %2144 = vmatmul.mubr.f32.gmra.mrb[0].mxu0 %v2143
    %v2145 = vpop.f32.mrb[0].mxu0
    %v2146 = vadd.f32 %v1995, %v2145
    %v2147 = vpop.f32.mrb[0].mxu0
    %2148 = vdwg.mxu0
    %2149 = vmatprep.subr.mxu0 0.0
    %v2150 = vand.u32 %v1884, 4294901760
    %v2151 = vsub.f32 %v1884, %v2150
    %2152 = vmatpush1.msra.mxu0 %v2151
    %2153 = vmatprep.subr.mxu0 0.0
    %v2154 = vand.u32 %v1885, 4294901760
    %v2155 = vsub.f32 %v1885, %v2154
    %2156 = vmatpush1.msra.mxu0 %v2155
    %2157 = vmatprep.subr.mxu0 0.0
    %v2158 = vand.u32 %v1886, 4294901760
    %v2159 = vsub.f32 %v1886, %v2158
    %2160 = vmatpush1.msra.mxu0 %v2159
    %2161 = vmatprep.subr.mxu0 0.0
    %v2162 = vand.u32 %v1887, 4294901760
    %v2163 = vsub.f32 %v1887, %v2162
    %2164 = vmatpush1.msra.mxu0 %v2163
    %2165 = vmatprep.subr.mxu0 0.0
    %v2166 = vand.u32 %v1888, 4294901760
    %v2167 = vsub.f32 %v1888, %v2166
    %2168 = vmatpush1.msra.mxu0 %v2167
    %2169 = vmatprep.subr.mxu0 0.0
    %v2170 = vand.u32 %v1889, 4294901760
    %v2171 = vsub.f32 %v1889, %v2170
    %2172 = vmatpush1.msra.mxu0 %v2171
    %2173 = vmatprep.subr.mxu0 0.0
    %v2174 = vand.u32 %v1890, 4294901760
    %v2175 = vsub.f32 %v1890, %v2174
    %2176 = vmatpush1.msra.mxu0 %v2175
    %2177 = vmatprep.subr.mxu0 0.0
    %v2178 = vand.u32 %v1891, 4294901760
    %v2179 = vsub.f32 %v1891, %v2178
    %2180 = vmatpush1.msra.mxu0 %v2179
    %2181 = vmatprep.subr.mxu0 0.0
    %v2182 = vand.u32 %v1892, 4294901760
    %v2183 = vsub.f32 %v1892, %v2182
    %2184 = vmatpush1.msra.mxu0 %v2183
    %2185 = vmatprep.subr.mxu0 0.0
    %v2186 = vand.u32 %v1893, 4294901760
    %v2187 = vsub.f32 %v1893, %v2186
    %2188 = vmatpush1.msra.mxu0 %v2187
    %2189 = vmatprep.subr.mxu0 0.0
    %v2190 = vand.u32 %v1894, 4294901760
    %v2191 = vsub.f32 %v1894, %v2190
    %2192 = vmatpush1.msra.mxu0 %v2191
    %2193 = vmatprep.subr.mxu0 0.0
    %v2194 = vand.u32 %v1895, 4294901760
    %v2195 = vsub.f32 %v1895, %v2194
    %2196 = vmatpush1.msra.mxu0 %v2195
    %2197 = vmatprep.subr.mxu0 0.0
    %v2198 = vand.u32 %v1896, 4294901760
    %v2199 = vsub.f32 %v1896, %v2198
    %2200 = vmatpush1.msra.mxu0 %v2199
    %2201 = vmatprep.subr.mxu0 0.0
    %v2202 = vand.u32 %v1897, 4294901760
    %v2203 = vsub.f32 %v1897, %v2202
    %2204 = vmatpush1.msra.mxu0 %v2203
    %2205 = vmatprep.subr.mxu0 0.0
    %v2206 = vand.u32 %v1898, 4294901760
    %v2207 = vsub.f32 %v1898, %v2206
    %2208 = vmatpush1.msra.mxu0 %v2207
    %2209 = vmatprep.subr.mxu0 0.0
    %v2210 = vand.u32 %v1899, 4294901760
    %v2211 = vsub.f32 %v1899, %v2210
    %2212 = vmatpush1.msra.mxu0 %v2211
    %2213 = vmatprep.subr.mxu0 0.0
    %2214 = vmatpush1.msra.mxu0 0.0
    %2215 = vmatprep.subr.mxu0 0.0
    %2216 = vmatpush1.msra.mxu0 0.0
    %2217 = vmatprep.subr.mxu0 0.0
    %2218 = vmatpush1.msra.mxu0 0.0
    %2219 = vmatprep.subr.mxu0 0.0
    %2220 = vmatpush1.msra.mxu0 0.0
    %2221 = vmatprep.subr.mxu0 0.0
    %2222 = vmatpush1.msra.mxu0 0.0
    %2223 = vmatprep.subr.mxu0 0.0
    %2224 = vmatpush1.msra.mxu0 0.0
    %2225 = vmatprep.subr.mxu0 0.0
    %2226 = vmatpush1.msra.mxu0 0.0
    %2227 = vmatprep.subr.mxu0 0.0
    %2228 = vmatpush1.msra.mxu0 0.0
    %2229 = vmatprep.subr.mxu0 0.0
    %2230 = vmatpush1.msra.mxu0 0.0
    %2231 = vmatprep.subr.mxu0 0.0
    %2232 = vmatpush1.msra.mxu0 0.0
    %2233 = vmatprep.subr.mxu0 0.0
    %2234 = vmatpush1.msra.mxu0 0.0
    %2235 = vmatprep.subr.mxu0 0.0
    %2236 = vmatpush1.msra.mxu0 0.0
    %2237 = vmatprep.subr.mxu0 0.0
    %2238 = vmatpush1.msra.mxu0 0.0
    %2239 = vmatprep.subr.mxu0 0.0
    %2240 = vmatpush1.msra.mxu0 0.0
    %2241 = vmatprep.subr.mxu0 0.0
    %2242 = vmatpush1.msra.mxu0 0.0
    %2243 = vmatprep.subr.mxu0 0.0
    %2244 = vmatpush1.msra.mxu0 0.0
    %2245 = vmatprep.mubr.f32.mxu0 0.0
    %v2246 = vand.u32 %v1883, 4294901760
    %v2247 = vsub.f32 %v1883, %v2246
    %2248 = vmatmul.mubr.f32.gmra.mrb[0].mxu0 %v2247
    %v2249 = vpop.f32.mrb[0].mxu0
    %v2250 = vadd.f32 %v2146, %v2249
    %v2251 = vpop.f32.mrb[0].mxu0
    %2252 = vdwg.mxu0
    %2253 = vmatprep.subr.mxu0 0.0
    %v2254 = vand.u32 %v1884, 4294901760
    %2255 = vmatpush1.msra.mxu0 %v2254
    %2256 = vmatprep.subr.mxu0 0.0
    %v2257 = vand.u32 %v1885, 4294901760
    %2258 = vmatpush1.msra.mxu0 %v2257
    %2259 = vmatprep.subr.mxu0 0.0
    %v2260 = vand.u32 %v1886, 4294901760
    %2261 = vmatpush1.msra.mxu0 %v2260
    %2262 = vmatprep.subr.mxu0 0.0
    %v2263 = vand.u32 %v1887, 4294901760
    %2264 = vmatpush1.msra.mxu0 %v2263
    %2265 = vmatprep.subr.mxu0 0.0
    %v2266 = vand.u32 %v1888, 4294901760
    %2267 = vmatpush1.msra.mxu0 %v2266
    %2268 = vmatprep.subr.mxu0 0.0
    %v2269 = vand.u32 %v1889, 4294901760
    %2270 = vmatpush1.msra.mxu0 %v2269
    %2271 = vmatprep.subr.mxu0 0.0
    %v2272 = vand.u32 %v1890, 4294901760
    %2273 = vmatpush1.msra.mxu0 %v2272
    %2274 = vmatprep.subr.mxu0 0.0
    %v2275 = vand.u32 %v1891, 4294901760
    %2276 = vmatpush1.msra.mxu0 %v2275
    %2277 = vmatprep.subr.mxu0 0.0
    %v2278 = vand.u32 %v1892, 4294901760
    %2279 = vmatpush1.msra.mxu0 %v2278
    %2280 = vmatprep.subr.mxu0 0.0
    %v2281 = vand.u32 %v1893, 4294901760
    %2282 = vmatpush1.msra.mxu0 %v2281
    %2283 = vmatprep.subr.mxu0 0.0
    %v2284 = vand.u32 %v1894, 4294901760
    %2285 = vmatpush1.msra.mxu0 %v2284
    %2286 = vmatprep.subr.mxu0 0.0
    %v2287 = vand.u32 %v1895, 4294901760
    %2288 = vmatpush1.msra.mxu0 %v2287
    %2289 = vmatprep.subr.mxu0 0.0
    %v2290 = vand.u32 %v1896, 4294901760
    %2291 = vmatpush1.msra.mxu0 %v2290
    %2292 = vmatprep.subr.mxu0 0.0
    %v2293 = vand.u32 %v1897, 4294901760
    %2294 = vmatpush1.msra.mxu0 %v2293
    %2295 = vmatprep.subr.mxu0 0.0
    %v2296 = vand.u32 %v1898, 4294901760
    %2297 = vmatpush1.msra.mxu0 %v2296
    %2298 = vmatprep.subr.mxu0 0.0
    %v2299 = vand.u32 %v1899, 4294901760
    %2300 = vmatpush1.msra.mxu0 %v2299
    %2301 = vmatprep.subr.mxu0 0.0
    %2302 = vmatpush1.msra.mxu0 0.0
    %2303 = vmatprep.subr.mxu0 0.0
    %2304 = vmatpush1.msra.mxu0 0.0
    %2305 = vmatprep.subr.mxu0 0.0
    %2306 = vmatpush1.msra.mxu0 0.0
    %2307 = vmatprep.subr.mxu0 0.0
    %2308 = vmatpush1.msra.mxu0 0.0
    %2309 = vmatprep.subr.mxu0 0.0
    %2310 = vmatpush1.msra.mxu0 0.0
    %2311 = vmatprep.subr.mxu0 0.0
    %2312 = vmatpush1.msra.mxu0 0.0
    %2313 = vmatprep.subr.mxu0 0.0
    %2314 = vmatpush1.msra.mxu0 0.0
    %2315 = vmatprep.subr.mxu0 0.0
    %2316 = vmatpush1.msra.mxu0 0.0
    %2317 = vmatprep.subr.mxu0 0.0
    %2318 = vmatpush1.msra.mxu0 0.0
    %2319 = vmatprep.subr.mxu0 0.0
    %2320 = vmatpush1.msra.mxu0 0.0
    %2321 = vmatprep.subr.mxu0 0.0
    %2322 = vmatpush1.msra.mxu0 0.0
    %2323 = vmatprep.subr.mxu0 0.0
    %2324 = vmatpush1.msra.mxu0 0.0
    %2325 = vmatprep.subr.mxu0 0.0
    %2326 = vmatpush1.msra.mxu0 0.0
    %2327 = vmatprep.subr.mxu0 0.0
    %2328 = vmatpush1.msra.mxu0 0.0
    %2329 = vmatprep.subr.mxu0 0.0
    %2330 = vmatpush1.msra.mxu0 0.0
    %2331 = vmatprep.subr.mxu0 0.0
    %2332 = vmatpush1.msra.mxu0 0.0
    %2333 = vmatprep.mubr.f32.mxu0 0.0
    %v2334 = vand.u32 %v1883, 4294901760
    %v2335 = vsub.f32 %v1883, %v2334
    %v2336 = vand.u32 %v2335, 4294901760
    %2337 = vmatmul.mubr.f32.gmra.mrb[0].mxu0 %v2336
    %v2338 = vpop.f32.mrb[0].mxu0
    %v2339 = vadd.f32 %v2250, %v2338
    %v2340 = vpop.f32.mrb[0].mxu0
    %2341 = vdwg.mxu0
    %2342 = vmatprep.subr.mxu0 0.0
    %v2343 = vand.u32 %v1884, 4294901760
    %v2344 = vsub.f32 %v1884, %v2343
    %v2345 = vand.u32 %v2344, 4294901760
    %2346 = vmatpush1.msra.mxu0 %v2345
    %2347 = vmatprep.subr.mxu0 0.0
    %v2348 = vand.u32 %v1885, 4294901760
    %v2349 = vsub.f32 %v1885, %v2348
    %v2350 = vand.u32 %v2349, 4294901760
    %2351 = vmatpush1.msra.mxu0 %v2350
    %2352 = vmatprep.subr.mxu0 0.0
    %v2353 = vand.u32 %v1886, 4294901760
    %v2354 = vsub.f32 %v1886, %v2353
    %v2355 = vand.u32 %v2354, 4294901760
    %2356 = vmatpush1.msra.mxu0 %v2355
    %2357 = vmatprep.subr.mxu0 0.0
    %v2358 = vand.u32 %v1887, 4294901760
    %v2359 = vsub.f32 %v1887, %v2358
    %v2360 = vand.u32 %v2359, 4294901760
    %2361 = vmatpush1.msra.mxu0 %v2360
    %2362 = vmatprep.subr.mxu0 0.0
    %v2363 = vand.u32 %v1888, 4294901760
    %v2364 = vsub.f32 %v1888, %v2363
    %v2365 = vand.u32 %v2364, 4294901760
    %2366 = vmatpush1.msra.mxu0 %v2365
    %2367 = vmatprep.subr.mxu0 0.0
    %v2368 = vand.u32 %v1889, 4294901760
    %v2369 = vsub.f32 %v1889, %v2368
    %v2370 = vand.u32 %v2369, 4294901760
    %2371 = vmatpush1.msra.mxu0 %v2370
    %2372 = vmatprep.subr.mxu0 0.0
    %v2373 = vand.u32 %v1890, 4294901760
    %v2374 = vsub.f32 %v1890, %v2373
    %v2375 = vand.u32 %v2374, 4294901760
    %2376 = vmatpush1.msra.mxu0 %v2375
    %2377 = vmatprep.subr.mxu0 0.0
    %v2378 = vand.u32 %v1891, 4294901760
    %v2379 = vsub.f32 %v1891, %v2378
    %v2380 = vand.u32 %v2379, 4294901760
    %2381 = vmatpush1.msra.mxu0 %v2380
    %2382 = vmatprep.subr.mxu0 0.0
    %v2383 = vand.u32 %v1892, 4294901760
    %v2384 = vsub.f32 %v1892, %v2383
    %v2385 = vand.u32 %v2384, 4294901760
    %2386 = vmatpush1.msra.mxu0 %v2385
    %2387 = vmatprep.subr.mxu0 0.0
    %v2388 = vand.u32 %v1893, 4294901760
    %v2389 = vsub.f32 %v1893, %v2388
    %v2390 = vand.u32 %v2389, 4294901760
    %2391 = vmatpush1.msra.mxu0 %v2390
    %2392 = vmatprep.subr.mxu0 0.0
    %v2393 = vand.u32 %v1894, 4294901760
    %v2394 = vsub.f32 %v1894, %v2393
    %v2395 = vand.u32 %v2394, 4294901760
    %2396 = vmatpush1.msra.mxu0 %v2395
    %2397 = vmatprep.subr.mxu0 0.0
    %v2398 = vand.u32 %v1895, 4294901760
    %v2399 = vsub.f32 %v1895, %v2398
    %v2400 = vand.u32 %v2399, 4294901760
    %2401 = vmatpush1.msra.mxu0 %v2400
    %2402 = vmatprep.subr.mxu0 0.0
    %v2403 = vand.u32 %v1896, 4294901760
    %v2404 = vsub.f32 %v1896, %v2403
    %v2405 = vand.u32 %v2404, 4294901760
    %2406 = vmatpush1.msra.mxu0 %v2405
    %2407 = vmatprep.subr.mxu0 0.0
    %v2408 = vand.u32 %v1897, 4294901760
    %v2409 = vsub.f32 %v1897, %v2408
    %v2410 = vand.u32 %v2409, 4294901760
    %2411 = vmatpush1.msra.mxu0 %v2410
    %2412 = vmatprep.subr.mxu0 0.0
    %v2413 = vand.u32 %v1898, 4294901760
    %v2414 = vsub.f32 %v1898, %v2413
    %v2415 = vand.u32 %v2414, 4294901760
    %2416 = vmatpush1.msra.mxu0 %v2415
    %2417 = vmatprep.subr.mxu0 0.0
    %v2418 = vand.u32 %v1899, 4294901760
    %v2419 = vsub.f32 %v1899, %v2418
    %v2420 = vand.u32 %v2419, 4294901760
    %2421 = vmatpush1.msra.mxu0 %v2420
    %2422 = vmatprep.subr.mxu0 0.0
    %2423 = vmatpush1.msra.mxu0 0.0
    %2424 = vmatprep.subr.mxu0 0.0
    %2425 = vmatpush1.msra.mxu0 0.0
    %2426 = vmatprep.subr.mxu0 0.0
    %2427 = vmatpush1.msra.mxu0 0.0
    %2428 = vmatprep.subr.mxu0 0.0
    %2429 = vmatpush1.msra.mxu0 0.0
    %2430 = vmatprep.subr.mxu0 0.0
    %2431 = vmatpush1.msra.mxu0 0.0
    %2432 = vmatprep.subr.mxu0 0.0
    %2433 = vmatpush1.msra.mxu0 0.0
    %2434 = vmatprep.subr.mxu0 0.0
    %2435 = vmatpush1.msra.mxu0 0.0
    %2436 = vmatprep.subr.mxu0 0.0
    %2437 = vmatpush1.msra.mxu0 0.0
    %2438 = vmatprep.subr.mxu0 0.0
    %2439 = vmatpush1.msra.mxu0 0.0
    %2440 = vmatprep.subr.mxu0 0.0
    %2441 = vmatpush1.msra.mxu0 0.0
    %2442 = vmatprep.subr.mxu0 0.0
    %2443 = vmatpush1.msra.mxu0 0.0
    %2444 = vmatprep.subr.mxu0 0.0
    %2445 = vmatpush1.msra.mxu0 0.0
    %2446 = vmatprep.subr.mxu0 0.0
    %2447 = vmatpush1.msra.mxu0 0.0
    %2448 = vmatprep.subr.mxu0 0.0
    %2449 = vmatpush1.msra.mxu0 0.0
    %2450 = vmatprep.subr.mxu0 0.0
    %2451 = vmatpush1.msra.mxu0 0.0
    %2452 = vmatprep.subr.mxu0 0.0
    %2453 = vmatpush1.msra.mxu0 0.0
    %2454 = vmatprep.mubr.f32.mxu0 0.0
    %v2455 = vand.u32 %v1883, 4294901760
    %2456 = vmatmul.mubr.f32.gmra.mrb[0].mxu0 %v2455
    %v2457 = vpop.f32.mrb[0].mxu0
    %v2458 = vadd.f32 %v2339, %v2457
    %v2459 = vpop.f32.mrb[0].mxu0
    %2460 = vdwg.mxu0
    %2461 = vmatprep.subr.mxu0 0.0
    %v2462 = vand.u32 %v1884, 4294901760
    %2463 = vmatpush1.msra.mxu0 %v2462
    %2464 = vmatprep.subr.mxu0 0.0
    %v2465 = vand.u32 %v1885, 4294901760
    %2466 = vmatpush1.msra.mxu0 %v2465
    %2467 = vmatprep.subr.mxu0 0.0
    %v2468 = vand.u32 %v1886, 4294901760
    %2469 = vmatpush1.msra.mxu0 %v2468
    %2470 = vmatprep.subr.mxu0 0.0
    %v2471 = vand.u32 %v1887, 4294901760
    %2472 = vmatpush1.msra.mxu0 %v2471
    %2473 = vmatprep.subr.mxu0 0.0
    %v2474 = vand.u32 %v1888, 4294901760
    %2475 = vmatpush1.msra.mxu0 %v2474
    %2476 = vmatprep.subr.mxu0 0.0
    %v2477 = vand.u32 %v1889, 4294901760
    %2478 = vmatpush1.msra.mxu0 %v2477
    %2479 = vmatprep.subr.mxu0 0.0
    %v2480 = vand.u32 %v1890, 4294901760
    %2481 = vmatpush1.msra.mxu0 %v2480
    %2482 = vmatprep.subr.mxu0 0.0
    %v2483 = vand.u32 %v1891, 4294901760
    %2484 = vmatpush1.msra.mxu0 %v2483
    %2485 = vmatprep.subr.mxu0 0.0
    %v2486 = vand.u32 %v1892, 4294901760
    %2487 = vmatpush1.msra.mxu0 %v2486
    %2488 = vmatprep.subr.mxu0 0.0
    %v2489 = vand.u32 %v1893, 4294901760
    %2490 = vmatpush1.msra.mxu0 %v2489
    %2491 = vmatprep.subr.mxu0 0.0
    %v2492 = vand.u32 %v1894, 4294901760
    %2493 = vmatpush1.msra.mxu0 %v2492
    %2494 = vmatprep.subr.mxu0 0.0
    %v2495 = vand.u32 %v1895, 4294901760
    %2496 = vmatpush1.msra.mxu0 %v2495
    %2497 = vmatprep.subr.mxu0 0.0
    %v2498 = vand.u32 %v1896, 4294901760
    %2499 = vmatpush1.msra.mxu0 %v2498
    %2500 = vmatprep.subr.mxu0 0.0
    %v2501 = vand.u32 %v1897, 4294901760
    %2502 = vmatpush1.msra.mxu0 %v2501
    %2503 = vmatprep.subr.mxu0 0.0
    %v2504 = vand.u32 %v1898, 4294901760
    %2505 = vmatpush1.msra.mxu0 %v2504
    %2506 = vmatprep.subr.mxu0 0.0
    %v2507 = vand.u32 %v1899, 4294901760
    %2508 = vmatpush1.msra.mxu0 %v2507
    %2509 = vmatprep.subr.mxu0 0.0
    %2510 = vmatpush1.msra.mxu0 0.0
    %2511 = vmatprep.subr.mxu0 0.0
    %2512 = vmatpush1.msra.mxu0 0.0
    %2513 = vmatprep.subr.mxu0 0.0
    %2514 = vmatpush1.msra.mxu0 0.0
    %2515 = vmatprep.subr.mxu0 0.0
    %2516 = vmatpush1.msra.mxu0 0.0
    %2517 = vmatprep.subr.mxu0 0.0
    %2518 = vmatpush1.msra.mxu0 0.0
    %2519 = vmatprep.subr.mxu0 0.0
    %2520 = vmatpush1.msra.mxu0 0.0
    %2521 = vmatprep.subr.mxu0 0.0
    %2522 = vmatpush1.msra.mxu0 0.0
    %2523 = vmatprep.subr.mxu0 0.0
    %2524 = vmatpush1.msra.mxu0 0.0
    %2525 = vmatprep.subr.mxu0 0.0
    %2526 = vmatpush1.msra.mxu0 0.0
    %2527 = vmatprep.subr.mxu0 0.0
    %2528 = vmatpush1.msra.mxu0 0.0
    %2529 = vmatprep.subr.mxu0 0.0
    %2530 = vmatpush1.msra.mxu0 0.0
    %2531 = vmatprep.subr.mxu0 0.0
    %2532 = vmatpush1.msra.mxu0 0.0
    %2533 = vmatprep.subr.mxu0 0.0
    %2534 = vmatpush1.msra.mxu0 0.0
    %2535 = vmatprep.subr.mxu0 0.0
    %2536 = vmatpush1.msra.mxu0 0.0
    %2537 = vmatprep.subr.mxu0 0.0
    %2538 = vmatpush1.msra.mxu0 0.0
    %2539 = vmatprep.subr.mxu0 0.0
    %2540 = vmatpush1.msra.mxu0 0.0
    %2541 = vmatprep.mubr.f32.mxu0 0.0
    %v2542 = vand.u32 %v1883, 4294901760
    %2543 = vmatmul.mubr.f32.gmra.mrb[0].mxu0 %v2542
    %v2544 = vpop.f32.mrb[0].mxu0
    %v2545 = vadd.f32 %v2458, %v2544
    %v2546 = vpop.f32.mrb[0].mxu0
    %2547 = vdwg.mxu0
    %v2548 = vlaneseq
    %v2549 = vand.u32 %v2548, 127
    %vm2550 = vcmp.eq.s32.totalorder %v2549, 127
    %v2551 = vsel %vm2550, -1e+30, %v2545
    %2552 = vmax.xlane.f32.xlu0 %v2551
    %v2553 = vpop.xlane.xlu0 %2552
    %v2554 = vsub.f32 %v2551, %v2553
    %v2555 = vmul.f32 %v2554, 1.442695
    %v2556 = vpow.pop %v2555
    %2557 = vadd.xlane.f32.xlu0 %v2556
    %v2558 = vpop.xlane.xlu0 %2557
    %v2559 = vrcp.pop %v2558
    %v2560 = vmul.f32 %v2556, %v2559
    %2562 = vset.pattern.permute.xlu0 127
    %2563 = vperm.xlu0 %2562, %v2545
    %v2564 = vpop.permute.xlu0 %2563
    %v2566 = vsel %vm2550, %v2564, %v2560
    %2567 = vst [vmem:[#allocation10] sm:$0xff] %v2566
    // Predicated region
    $region46: #{tpu_custom_call.1} parent=1 // pred_check
      _
    $region47: #{tpu_custom_call.1} parent=1 // pred_check_branch
      %2569 = sbr.rel (0) target = $region49
    $region48: #{tpu_custom_call.1} parent=1 // pred_region
      %s2571 = ssub.s32 128, 128
      %2572 = vsyncadd [#allocation4], %s2571
      %s2574 = sshll.u32 [#allocation10], 4
      %s2575 = int_to_ptr.vmem [resolvable:$true] %s2574
      %2577 = dma.vmem_to_hbm [thread:$0]  %s2575, 128, %s7, [#allocation4]
    $region49: #{tpu_custom_call.1} parent=1 // pred_fallthru
      _
    // Predicated region
    $region50: #{tpu_custom_call.1} parent=1 // pred_check
      _
    $region51: #{tpu_custom_call.1} parent=1 // pred_check_branch
      %2579 = sbr.rel (0) target = $region53
    $region52: #{tpu_custom_call.1} parent=1 // pred_region
      %2580 = dma.done [#allocation4], 128
    $region53: #{tpu_custom_call.1} parent=1 // pred_fallthru
      _
    %2581 = vsyncpa [#allocation3], 1
    %2582 = vsyncpa [#allocation6], 1
    %2583 = vsyncpa [#allocation9], 1
    %2584 = vsyncpa [#allocation4], 1

</llo_original>
